<compile_context>
chip_gen: v7x
topology: tpu7x:2x2x1
jax: 0.10.0
libtpu: 0.0.40
codegen_flags: <defaults>
</compile_context>

<pallas_src>
import math

import jax
import jax.numpy as jnp
import numpy as np
from jax.experimental import pallas as pl
from jax.experimental.pallas import tpu as pltpu

# ----------------------------- small config -------------------------------------
BATCH = 2
SEQ = 8
NUM_ITEMS = 64
EMB = 32                    # embedding_dim
HIDDEN = 32                 # hidden_dim
GATES = 4 * HIDDEN          # 128 -> exactly one lane tile
OUT_PAD = 128               # num_items (64) padded to a full lane tile
NUM_LAYERS = 2

# packed-weight row offsets (all 8-aligned => cheap in-kernel sublane views)
W_IH0 = 0                   # (EMB, GATES)              rows   0..31
W_HH0 = 32                  # (HIDDEN, GATES)           rows  32..63
B0 = 64                     # (1, GATES)                row   64
W_L1 = 72                   # (2*HIDDEN, GATES) [wih1;whh1]  rows 72..135
B1 = 136                    # (1, GATES)                row  136
W_OUT = 144                 # (HIDDEN, OUT_PAD)         rows 144..175
B_OUT = 176                 # (1, OUT_PAD)              row  176
W_ROWS = 184


def _sigmoid(x):
    return 1.0 / (1.0 + jnp.exp(-x))


# ------------------------------ Pallas kernel ------------------------------------
def fused_recommender_kernel(seq_ref, emb_ref, w_ref, out_ref):
    """Embedding gather + fused 2-layer LSTM + output projection.

    Row layout is time-major: row index = t*BATCH + b.
    """
    # ---- static weight views out of the single packed VMEM slab ----
    wih0 = w_ref[W_IH0:W_IH0 + EMB, :]
    whh0 = w_ref[W_HH0:W_HH0 + HIDDEN, :]
    b0 = w_ref[B0:B0 + 1, :]
    w1 = w_ref[W_L1:W_L1 + 2 * HIDDEN, :]          # [wih1 ; whh1] contiguous
    b1 = w_ref[B1:B1 + 1, :]
    wout = w_ref[W_OUT:W_OUT + HIDDEN, :]
    bout = w_ref[B_OUT:B_OUT + 1, :]

    # ---- in-kernel embedding gather (ids from SMEM, table rows from VMEM) ----
    rows = []
    for t in range(SEQ):
        for b in range(BATCH):
            idx = seq_ref[b, t]
            rows.append(emb_ref[pl.ds(idx, 1), :])
    x = jnp.concatenate(rows, axis=0)               # (SEQ*BATCH, EMB)

    # ---- layer-0 input->gate projection: one lane-dense matmul ----
    gx0 = jnp.dot(x, wih0, preferred_element_type=jnp.float32) + b0   # (16,128)

    # Fused gate nonlinearity: sigmoid(x) = 0.5*tanh(0.5x)+0.5 on the i/f/o
    # lanes, tanh(x) on the cell-candidate lanes [2H, 3H). Constants hoisted.
    lane = jax.lax.broadcasted_iota(jnp.int32, (1, GATES), 1)
    is_g = (lane >= 2 * HIDDEN) & (lane < 3 * HIDDEN)
    pre = jnp.where(is_g, 1.0, 0.5).astype(jnp.float32)
    post_m = jnp.where(is_g, 1.0, 0.5).astype(jnp.float32)
    post_a = jnp.where(is_g, 0.0, 0.5).astype(jnp.float32)

    def gate_act(g):
        t = jnp.tanh(g * pre)                        # one full-width EUP push
        return t * post_m + post_a

    def lstm_cell(act, c):
        i = act[:, 0 * HIDDEN:1 * HIDDEN]
        f = act[:, 1 * HIDDEN:2 * HIDDEN]
        gc = act[:, 2 * HIDDEN:3 * HIDDEN]
        o = act[:, 3 * HIDDEN:4 * HIDDEN]
        c_new = f * c + i * gc
        h_new = o * jnp.tanh(c_new)
        return h_new, c_new

    zeros = jnp.zeros((BATCH, HIDDEN), jnp.float32)
    h0, c0 = zeros, zeros
    h1, c1 = zeros, zeros
    h1_steps = []

    # Both layers interleaved in ONE statically unrolled loop (single basic
    # block): layer-1's serial chain trails layer-0's by one dependence edge,
    # so the bundle scheduler overlaps the two recurrences; no scratch barrier.
    # TODO(synk): hold whh resident in MXU weight regs via matmul_push_rhs /
    # matmul_acc_lhs / matmul_pop instead of re-pushing it every step.
    for t in range(SEQ):
        # layer 0: precomputed input gates + recurrent matmul
        g0 = gx0[t * BATCH:(t + 1) * BATCH, :] + jnp.dot(
            h0, whh0, preferred_element_type=jnp.float32)
        h0, c0 = lstm_cell(gate_act(g0), c0)
        # layer 1: input + recurrent projection fused into one (B,2H)@(2H,4H)
        g1 = jnp.dot(jnp.concatenate([h0, h1], axis=1), w1,
                     preferred_element_type=jnp.float32) + b1
        h1, c1 = lstm_cell(gate_act(g1), c1)
        h1_steps.append(h1)

    # ---- output head on register-resident hidden slab: one 128-lane store ----
    hs1 = jnp.concatenate(h1_steps, axis=0)          # (SEQ*BATCH, HIDDEN)
    out_ref[...] = jnp.dot(hs1, wout, preferred_element_type=jnp.float32) + bout


# ------------------------------ wrapper ------------------------------------------
@jax.jit
def forward(sequences, params):
    out = pl.pallas_call(
        fused_recommender_kernel,
        out_shape=jax.ShapeDtypeStruct((SEQ * BATCH, OUT_PAD), jnp.float32),
        in_specs=[
            pl.BlockSpec(memory_space=pltpu.MemorySpace.SMEM),   # sequences (ids)
            pl.BlockSpec(memory_space=pltpu.MemorySpace.VMEM),   # embedding table
            pl.BlockSpec(memory_space=pltpu.MemorySpace.VMEM),   # packed weights
        ],
        out_specs=pl.BlockSpec(memory_space=pltpu.MemorySpace.VMEM),
    )(sequences, params['embedding'], params['w_packed'])

    # TODO(synk): optional `lengths` / pack_padded_sequence path not implemented
    # (reference default lengths=None path only).
    logits = jnp.transpose(out.reshape(SEQ, BATCH, OUT_PAD), (1, 0, 2))
    return logits[:, :, :NUM_ITEMS]                              # (B, S, num_items)


# ------------------------------ parameters ---------------------------------------
def init_params(key):
    kit = iter(jax.random.split(key, 16))

    def xavier(shape):
        std = math.sqrt(2.0 / (shape[0] + shape[1]))
        return (std * jax.random.normal(next(kit), shape)).astype(jnp.float32)

    p = {}
    emb = xavier((NUM_ITEMS + 1, EMB))
    p['embedding'] = emb.at[0].set(0.0)                           # padding_idx = 0

    # LSTM weights stored transposed for right-multiplication (in, 4H); gate
    # order [i|f|g|o] matches torch.nn.LSTM; biases zero-init per the reference.
    # TODO(synk): reference uses orthogonal init for rnn weights; xavier-normal
    # used here (init scheme does not change forward semantics).
    p['wih0'] = xavier((EMB, GATES))
    p['whh0'] = xavier((HIDDEN, GATES))
    p['b0'] = jnp.zeros((1, GATES), jnp.float32)
    p['wih1'] = xavier((HIDDEN, GATES))
    p['whh1'] = xavier((HIDDEN, GATES))
    p['b1'] = jnp.zeros((1, GATES), jnp.float32)

    wout = xavier((HIDDEN, NUM_ITEMS))
    p['wout'] = jnp.zeros((HIDDEN, OUT_PAD), jnp.float32).at[:, :NUM_ITEMS].set(wout)
    p['bout'] = jnp.zeros((1, OUT_PAD), jnp.float32)

    # single packed (184, 128) weight slab; padding rows stay zero and padded
    # wout columns stay zero (sliced off in the wrapper).
    w = jnp.zeros((W_ROWS, OUT_PAD), jnp.float32)
    w = w.at[W_IH0:W_IH0 + EMB, :].set(p['wih0'])
    w = w.at[W_HH0:W_HH0 + HIDDEN, :].set(p['whh0'])
    w = w.at[B0, :].set(p['b0'][0])
    w = w.at[W_L1:W_L1 + HIDDEN, :].set(p['wih1'])
    w = w.at[W_L1 + HIDDEN:W_L1 + 2 * HIDDEN, :].set(p['whh1'])
    w = w.at[B1, :].set(p['b1'][0])
    w = w.at[W_OUT:W_OUT + HIDDEN, :].set(p['wout'])
    w = w.at[B_OUT, :].set(p['bout'][0])
    p['w_packed'] = w
    return p


# --------------------------- pure-JAX reference ----------------------------------
@jax.jit
def reference_forward(sequences, params):
    emb = params['embedding'][sequences]                          # (B, S, E)

    def layer(x, wih, whh, b):
        def step(carry, x_t):
            h, c = carry
            g = x_t @ wih + h @ whh + b
            i = _sigmoid(g[:, :HIDDEN])
            f = _sigmoid(g[:, HIDDEN:2 * HIDDEN])
            gc = jnp.tanh(g[:, 2 * HIDDEN:3 * HIDDEN])
            o = _sigmoid(g[:, 3 * HIDDEN:])
            c = f * c + i * gc
            h = o * jnp.tanh(c)
            return (h, c), h

        init = (jnp.zeros((x.shape[0], HIDDEN), jnp.float32),
                jnp.zeros((x.shape[0], HIDDEN), jnp.float32))
        _, hs = jax.lax.scan(step, init, jnp.transpose(x, (1, 0, 2)))
        return jnp.transpose(hs, (1, 0, 2))

    h = layer(emb, params['wih0'], params['whh0'], params['b0'])
    h = layer(h, params['wih1'], params['whh1'], params['b1'])
    return h @ params['wout'][:, :NUM_ITEMS] + params['bout'][:, :NUM_ITEMS]


# ----------------------------------- main -----------------------------------------
if __name__ == "__main__":
    key = jax.random.PRNGKey(0)
    pkey, dkey = jax.random.split(key)
    params = init_params(pkey)
    sequences = jax.random.randint(dkey, (BATCH, SEQ), minval=1, maxval=NUM_ITEMS + 1,
                                   dtype=jnp.int32)

    logits = jax.block_until_ready(forward(sequences, params))
    assert logits.shape == (BATCH, SEQ, NUM_ITEMS)
    assert bool(jnp.all(jnp.isfinite(logits)))

    ref = jax.block_until_ready(reference_forward(sequences, params))
    np.testing.assert_allclose(np.asarray(logits), np.asarray(ref), rtol=2e-3, atol=2e-3)

    print("KERNEL_OK")
</pallas_src>

<mosaic_0001>
module attributes {stable_mosaic.version = 11 : i64} {
  func.func @fused_recommender_kernel(%arg0: memref<2x8xi32, #tpu.memory_space<smem>>, %arg1: memref<65x32xf32, #tpu.memory_space<vmem>>, %arg2: memref<184x128xf32, #tpu.memory_space<vmem>>, %arg3: memref<16x128xf32, #tpu.memory_space<vmem>>) attributes {dimension_semantics = [], scalar_prefetch = 0 : i64, scratch_operands = 0 : i64, tpu.core_type = #tpu.core_type<tc>} {
    %c0 = arith.constant 0 : index
    %c0_0 = arith.constant 0 : index
    %0 = vector.load %arg2[%c0, %c0_0] : memref<184x128xf32, #tpu.memory_space<vmem>>, vector<32x128xf32>
    %c32 = arith.constant 32 : index
    %c0_1 = arith.constant 0 : index
    %1 = vector.load %arg2[%c32, %c0_1] : memref<184x128xf32, #tpu.memory_space<vmem>>, vector<32x128xf32>
    %c64 = arith.constant 64 : index
    %c0_2 = arith.constant 0 : index
    %2 = vector.load %arg2[%c64, %c0_2] : memref<184x128xf32, #tpu.memory_space<vmem>>, vector<1x128xf32>
    %c72 = arith.constant 72 : index
    %c0_3 = arith.constant 0 : index
    %3 = vector.load %arg2[%c72, %c0_3] : memref<184x128xf32, #tpu.memory_space<vmem>>, vector<64x128xf32>
    %c136 = arith.constant 136 : index
    %c0_4 = arith.constant 0 : index
    %4 = vector.load %arg2[%c136, %c0_4] : memref<184x128xf32, #tpu.memory_space<vmem>>, vector<1x128xf32>
    %c144 = arith.constant 144 : index
    %c0_5 = arith.constant 0 : index
    %5 = vector.load %arg2[%c144, %c0_5] : memref<184x128xf32, #tpu.memory_space<vmem>>, vector<32x128xf32>
    %c176 = arith.constant 176 : index
    %c0_6 = arith.constant 0 : index
    %6 = vector.load %arg2[%c176, %c0_6] : memref<184x128xf32, #tpu.memory_space<vmem>>, vector<1x128xf32>
    %c0_7 = arith.constant 0 : index
    %c0_8 = arith.constant 0 : index
    %7 = memref.load %arg0[%c0_7, %c0_8] : memref<2x8xi32, #tpu.memory_space<smem>>
    %8 = arith.index_cast %7 : i32 to index
    %c0_9 = arith.constant 0 : index
    %9 = vector.load %arg1[%8, %c0_9] : memref<65x32xf32, #tpu.memory_space<vmem>>, vector<1x32xf32>
    %c1 = arith.constant 1 : index
    %c0_10 = arith.constant 0 : index
    %10 = memref.load %arg0[%c1, %c0_10] : memref<2x8xi32, #tpu.memory_space<smem>>
    %11 = arith.index_cast %10 : i32 to index
    %c0_11 = arith.constant 0 : index
    %12 = vector.load %arg1[%11, %c0_11] : memref<65x32xf32, #tpu.memory_space<vmem>>, vector<1x32xf32>
    %c0_12 = arith.constant 0 : index
    %c1_13 = arith.constant 1 : index
    %13 = memref.load %arg0[%c0_12, %c1_13] : memref<2x8xi32, #tpu.memory_space<smem>>
    %14 = arith.index_cast %13 : i32 to index
    %c0_14 = arith.constant 0 : index
    %15 = vector.load %arg1[%14, %c0_14] : memref<65x32xf32, #tpu.memory_space<vmem>>, vector<1x32xf32>
    %c1_15 = arith.constant 1 : index
    %c1_16 = arith.constant 1 : index
    %16 = memref.load %arg0[%c1_15, %c1_16] : memref<2x8xi32, #tpu.memory_space<smem>>
    %17 = arith.index_cast %16 : i32 to index
    %c0_17 = arith.constant 0 : index
    %18 = vector.load %arg1[%17, %c0_17] : memref<65x32xf32, #tpu.memory_space<vmem>>, vector<1x32xf32>
    %c0_18 = arith.constant 0 : index
    %c2 = arith.constant 2 : index
    %19 = memref.load %arg0[%c0_18, %c2] : memref<2x8xi32, #tpu.memory_space<smem>>
    %20 = arith.index_cast %19 : i32 to index
    %c0_19 = arith.constant 0 : index
    %21 = vector.load %arg1[%20, %c0_19] : memref<65x32xf32, #tpu.memory_space<vmem>>, vector<1x32xf32>
    %c1_20 = arith.constant 1 : index
    %c2_21 = arith.constant 2 : index
    %22 = memref.load %arg0[%c1_20, %c2_21] : memref<2x8xi32, #tpu.memory_space<smem>>
    %23 = arith.index_cast %22 : i32 to index
    %c0_22 = arith.constant 0 : index
    %24 = vector.load %arg1[%23, %c0_22] : memref<65x32xf32, #tpu.memory_space<vmem>>, vector<1x32xf32>
    %c0_23 = arith.constant 0 : index
    %c3 = arith.constant 3 : index
    %25 = memref.load %arg0[%c0_23, %c3] : memref<2x8xi32, #tpu.memory_space<smem>>
    %26 = arith.index_cast %25 : i32 to index
    %c0_24 = arith.constant 0 : index
    %27 = vector.load %arg1[%26, %c0_24] : memref<65x32xf32, #tpu.memory_space<vmem>>, vector<1x32xf32>
    %c1_25 = arith.constant 1 : index
    %c3_26 = arith.constant 3 : index
    %28 = memref.load %arg0[%c1_25, %c3_26] : memref<2x8xi32, #tpu.memory_space<smem>>
    %29 = arith.index_cast %28 : i32 to index
    %c0_27 = arith.constant 0 : index
    %30 = vector.load %arg1[%29, %c0_27] : memref<65x32xf32, #tpu.memory_space<vmem>>, vector<1x32xf32>
    %c0_28 = arith.constant 0 : index
    %c4 = arith.constant 4 : index
    %31 = memref.load %arg0[%c0_28, %c4] : memref<2x8xi32, #tpu.memory_space<smem>>
    %32 = arith.index_cast %31 : i32 to index
    %c0_29 = arith.constant 0 : index
    %33 = vector.load %arg1[%32, %c0_29] : memref<65x32xf32, #tpu.memory_space<vmem>>, vector<1x32xf32>
    %c1_30 = arith.constant 1 : index
    %c4_31 = arith.constant 4 : index
    %34 = memref.load %arg0[%c1_30, %c4_31] : memref<2x8xi32, #tpu.memory_space<smem>>
    %35 = arith.index_cast %34 : i32 to index
    %c0_32 = arith.constant 0 : index
    %36 = vector.load %arg1[%35, %c0_32] : memref<65x32xf32, #tpu.memory_space<vmem>>, vector<1x32xf32>
    %c0_33 = arith.constant 0 : index
    %c5 = arith.constant 5 : index
    %37 = memref.load %arg0[%c0_33, %c5] : memref<2x8xi32, #tpu.memory_space<smem>>
    %38 = arith.index_cast %37 : i32 to index
    %c0_34 = arith.constant 0 : index
    %39 = vector.load %arg1[%38, %c0_34] : memref<65x32xf32, #tpu.memory_space<vmem>>, vector<1x32xf32>
    %c1_35 = arith.constant 1 : index
    %c5_36 = arith.constant 5 : index
    %40 = memref.load %arg0[%c1_35, %c5_36] : memref<2x8xi32, #tpu.memory_space<smem>>
    %41 = arith.index_cast %40 : i32 to index
    %c0_37 = arith.constant 0 : index
    %42 = vector.load %arg1[%41, %c0_37] : memref<65x32xf32, #tpu.memory_space<vmem>>, vector<1x32xf32>
    %c0_38 = arith.constant 0 : index
    %c6 = arith.constant 6 : index
    %43 = memref.load %arg0[%c0_38, %c6] : memref<2x8xi32, #tpu.memory_space<smem>>
    %44 = arith.index_cast %43 : i32 to index
    %c0_39 = arith.constant 0 : index
    %45 = vector.load %arg1[%44, %c0_39] : memref<65x32xf32, #tpu.memory_space<vmem>>, vector<1x32xf32>
    %c1_40 = arith.constant 1 : index
    %c6_41 = arith.constant 6 : index
    %46 = memref.load %arg0[%c1_40, %c6_41] : memref<2x8xi32, #tpu.memory_space<smem>>
    %47 = arith.index_cast %46 : i32 to index
    %c0_42 = arith.constant 0 : index
    %48 = vector.load %arg1[%47, %c0_42] : memref<65x32xf32, #tpu.memory_space<vmem>>, vector<1x32xf32>
    %c0_43 = arith.constant 0 : index
    %c7 = arith.constant 7 : index
    %49 = memref.load %arg0[%c0_43, %c7] : memref<2x8xi32, #tpu.memory_space<smem>>
    %50 = arith.index_cast %49 : i32 to index
    %c0_44 = arith.constant 0 : index
    %51 = vector.load %arg1[%50, %c0_44] : memref<65x32xf32, #tpu.memory_space<vmem>>, vector<1x32xf32>
    %c1_45 = arith.constant 1 : index
    %c7_46 = arith.constant 7 : index
    %52 = memref.load %arg0[%c1_45, %c7_46] : memref<2x8xi32, #tpu.memory_space<smem>>
    %53 = arith.index_cast %52 : i32 to index
    %c0_47 = arith.constant 0 : index
    %54 = vector.load %arg1[%53, %c0_47] : memref<65x32xf32, #tpu.memory_space<vmem>>, vector<1x32xf32>
    %55 = tpu.concatenate %9, %12, %15, %18, %21, %24, %27, %30, %33, %36, %39, %42, %45, %48, %51, %54 in 0 : vector<1x32xf32>, vector<1x32xf32>, vector<1x32xf32>, vector<1x32xf32>, vector<1x32xf32>, vector<1x32xf32>, vector<1x32xf32>, vector<1x32xf32>, vector<1x32xf32>, vector<1x32xf32>, vector<1x32xf32>, vector<1x32xf32>, vector<1x32xf32>, vector<1x32xf32>, vector<1x32xf32>, vector<1x32xf32> -> vector<16x32xf32>
    %cst = arith.constant dense<0.000000e+00> : vector<16x128xf32>
    %56 = tpu.matmul %55, %0, %cst {dimension_numbers = #tpu.dot_dimension_numbers<[1], [0], [0], [1], [0, 0, 1, 1], [], []>} : vector<16x32xf32>, vector<32x128xf32>, vector<16x128xf32> -> vector<16x128xf32>
    %57 = vector.broadcast %2 : vector<1x128xf32> to vector<16x128xf32>
    %58 = arith.addf %56, %57 : vector<16x128xf32>
    %59 = tpu.iota {dimensions = array<i32: 1>} : vector<1x128xi32>
    %c64_i32 = arith.constant 64 : i32
    %60 = vector.broadcast %c64_i32 : i32 to vector<1x128xi32>
    %61 = arith.cmpi sge, %59, %60 : vector<1x128xi32>
    %c96_i32 = arith.constant 96 : i32
    %62 = vector.broadcast %c96_i32 : i32 to vector<1x128xi32>
    %63 = arith.cmpi slt, %59, %62 : vector<1x128xi32>
    %64 = arith.andi %61, %63 : vector<1x128xi1>
    %cst_48 = arith.constant 1.000000e+00 : f32
    %cst_49 = arith.constant 5.000000e-01 : f32
    %65 = vector.broadcast %cst_48 : f32 to vector<1x128xf32>
    %66 = vector.broadcast %cst_49 : f32 to vector<1x128xf32>
    %67 = arith.select %64, %65, %66 : vector<1x128xi1>, vector<1x128xf32>
    %cst_50 = arith.constant 1.000000e+00 : f32
    %cst_51 = arith.constant 5.000000e-01 : f32
    %68 = vector.broadcast %cst_50 : f32 to vector<1x128xf32>
    %69 = vector.broadcast %cst_51 : f32 to vector<1x128xf32>
    %70 = arith.select %64, %68, %69 : vector<1x128xi1>, vector<1x128xf32>
    %cst_52 = arith.constant 0.000000e+00 : f32
    %cst_53 = arith.constant 5.000000e-01 : f32
    %71 = vector.broadcast %cst_52 : f32 to vector<1x128xf32>
    %72 = vector.broadcast %cst_53 : f32 to vector<1x128xf32>
    %73 = arith.select %64, %71, %72 : vector<1x128xi1>, vector<1x128xf32>
    %cst_54 = arith.constant 0.000000e+00 : f32
    %74 = vector.broadcast %cst_54 : f32 to vector<2x32xf32>
    %75 = vector.extract_strided_slice %58 {offsets = [0, 0], sizes = [2, 128], strides = [1, 1]} : vector<16x128xf32> to vector<2x128xf32>
    %cst_55 = arith.constant dense<0.000000e+00> : vector<2x128xf32>
    %76 = tpu.matmul %74, %1, %cst_55 {dimension_numbers = #tpu.dot_dimension_numbers<[1], [0], [0], [1], [0, 0, 1, 1], [], []>} : vector<2x32xf32>, vector<32x128xf32>, vector<2x128xf32> -> vector<2x128xf32>
    %77 = arith.addf %75, %76 : vector<2x128xf32>
    %78 = vector.broadcast %67 : vector<1x128xf32> to vector<2x128xf32>
    %79 = arith.mulf %77, %78 : vector<2x128xf32>
    %80 = math.tanh %79 : vector<2x128xf32>
    %81 = vector.broadcast %70 : vector<1x128xf32> to vector<2x128xf32>
    %82 = arith.mulf %80, %81 : vector<2x128xf32>
    %83 = vector.broadcast %73 : vector<1x128xf32> to vector<2x128xf32>
    %84 = arith.addf %82, %83 : vector<2x128xf32>
    %85 = vector.extract_strided_slice %84 {offsets = [0, 0], sizes = [2, 32], strides = [1, 1]} : vector<2x128xf32> to vector<2x32xf32>
    %86 = vector.extract_strided_slice %84 {offsets = [0, 32], sizes = [2, 32], strides = [1, 1]} : vector<2x128xf32> to vector<2x32xf32>
    %87 = vector.extract_strided_slice %84 {offsets = [0, 64], sizes = [2, 32], strides = [1, 1]} : vector<2x128xf32> to vector<2x32xf32>
    %88 = vector.extract_strided_slice %84 {offsets = [0, 96], sizes = [2, 32], strides = [1, 1]} : vector<2x128xf32> to vector<2x32xf32>
    %89 = arith.mulf %86, %74 : vector<2x32xf32>
    %90 = arith.mulf %85, %87 : vector<2x32xf32>
    %91 = arith.addf %89, %90 : vector<2x32xf32>
    %92 = math.tanh %91 : vector<2x32xf32>
    %93 = arith.mulf %88, %92 : vector<2x32xf32>
    %94 = tpu.concatenate %93, %74 in 1 : vector<2x32xf32>, vector<2x32xf32> -> vector<2x64xf32>
    %cst_56 = arith.constant dense<0.000000e+00> : vector<2x128xf32>
    %95 = tpu.matmul %94, %3, %cst_56 {dimension_numbers = #tpu.dot_dimension_numbers<[1], [0], [0], [1], [0, 0, 1, 1], [], []>} : vector<2x64xf32>, vector<64x128xf32>, vector<2x128xf32> -> vector<2x128xf32>
    %96 = vector.broadcast %4 : vector<1x128xf32> to vector<2x128xf32>
    %97 = arith.addf %95, %96 : vector<2x128xf32>
    %98 = vector.broadcast %67 : vector<1x128xf32> to vector<2x128xf32>
    %99 = arith.mulf %97, %98 : vector<2x128xf32>
    %100 = math.tanh %99 : vector<2x128xf32>
    %101 = vector.broadcast %70 : vector<1x128xf32> to vector<2x128xf32>
    %102 = arith.mulf %100, %101 : vector<2x128xf32>
    %103 = vector.broadcast %73 : vector<1x128xf32> to vector<2x128xf32>
    %104 = arith.addf %102, %103 : vector<2x128xf32>
    %105 = vector.extract_strided_slice %104 {offsets = [0, 0], sizes = [2, 32], strides = [1, 1]} : vector<2x128xf32> to vector<2x32xf32>
    %106 = vector.extract_strided_slice %104 {offsets = [0, 32], sizes = [2, 32], strides = [1, 1]} : vector<2x128xf32> to vector<2x32xf32>
    %107 = vector.extract_strided_slice %104 {offsets = [0, 64], sizes = [2, 32], strides = [1, 1]} : vector<2x128xf32> to vector<2x32xf32>
    %108 = vector.extract_strided_slice %104 {offsets = [0, 96], sizes = [2, 32], strides = [1, 1]} : vector<2x128xf32> to vector<2x32xf32>
    %109 = arith.mulf %106, %74 : vector<2x32xf32>
    %110 = arith.mulf %105, %107 : vector<2x32xf32>
    %111 = arith.addf %109, %110 : vector<2x32xf32>
    %112 = math.tanh %111 : vector<2x32xf32>
    %113 = arith.mulf %108, %112 : vector<2x32xf32>
    %114 = vector.extract_strided_slice %58 {offsets = [2, 0], sizes = [2, 128], strides = [1, 1]} : vector<16x128xf32> to vector<2x128xf32>
    %cst_57 = arith.constant dense<0.000000e+00> : vector<2x128xf32>
    %115 = tpu.matmul %93, %1, %cst_57 {dimension_numbers = #tpu.dot_dimension_numbers<[1], [0], [0], [1], [0, 0, 1, 1], [], []>} : vector<2x32xf32>, vector<32x128xf32>, vector<2x128xf32> -> vector<2x128xf32>
    %116 = arith.addf %114, %115 : vector<2x128xf32>
    %117 = vector.broadcast %67 : vector<1x128xf32> to vector<2x128xf32>
    %118 = arith.mulf %116, %117 : vector<2x128xf32>
    %119 = math.tanh %118 : vector<2x128xf32>
    %120 = vector.broadcast %70 : vector<1x128xf32> to vector<2x128xf32>
    %121 = arith.mulf %119, %120 : vector<2x128xf32>
    %122 = vector.broadcast %73 : vector<1x128xf32> to vector<2x128xf32>
    %123 = arith.addf %121, %122 : vector<2x128xf32>
    %124 = vector.extract_strided_slice %123 {offsets = [0, 0], sizes = [2, 32], strides = [1, 1]} : vector<2x128xf32> to vector<2x32xf32>
    %125 = vector.extract_strided_slice %123 {offsets = [0, 32], sizes = [2, 32], strides = [1, 1]} : vector<2x128xf32> to vector<2x32xf32>
    %126 = vector.extract_strided_slice %123 {offsets = [0, 64], sizes = [2, 32], strides = [1, 1]} : vector<2x128xf32> to vector<2x32xf32>
    %127 = vector.extract_strided_slice %123 {offsets = [0, 96], sizes = [2, 32], strides = [1, 1]} : vector<2x128xf32> to vector<2x32xf32>
    %128 = arith.mulf %125, %91 : vector<2x32xf32>
    %129 = arith.mulf %124, %126 : vector<2x32xf32>
    %130 = arith.addf %128, %129 : vector<2x32xf32>
    %131 = math.tanh %130 : vector<2x32xf32>
    %132 = arith.mulf %127, %131 : vector<2x32xf32>
    %133 = tpu.concatenate %132, %113 in 1 : vector<2x32xf32>, vector<2x32xf32> -> vector<2x64xf32>
    %cst_58 = arith.constant dense<0.000000e+00> : vector<2x128xf32>
    %134 = tpu.matmul %133, %3, %cst_58 {dimension_numbers = #tpu.dot_dimension_numbers<[1], [0], [0], [1], [0, 0, 1, 1], [], []>} : vector<2x64xf32>, vector<64x128xf32>, vector<2x128xf32> -> vector<2x128xf32>
    %135 = vector.broadcast %4 : vector<1x128xf32> to vector<2x128xf32>
    %136 = arith.addf %134, %135 : vector<2x128xf32>
    %137 = vector.broadcast %67 : vector<1x128xf32> to vector<2x128xf32>
    %138 = arith.mulf %136, %137 : vector<2x128xf32>
    %139 = math.tanh %138 : vector<2x128xf32>
    %140 = vector.broadcast %70 : vector<1x128xf32> to vector<2x128xf32>
    %141 = arith.mulf %139, %140 : vector<2x128xf32>
    %142 = vector.broadcast %73 : vector<1x128xf32> to vector<2x128xf32>
    %143 = arith.addf %141, %142 : vector<2x128xf32>
    %144 = vector.extract_strided_slice %143 {offsets = [0, 0], sizes = [2, 32], strides = [1, 1]} : vector<2x128xf32> to vector<2x32xf32>
    %145 = vector.extract_strided_slice %143 {offsets = [0, 32], sizes = [2, 32], strides = [1, 1]} : vector<2x128xf32> to vector<2x32xf32>
    %146 = vector.extract_strided_slice %143 {offsets = [0, 64], sizes = [2, 32], strides = [1, 1]} : vector<2x128xf32> to vector<2x32xf32>
    %147 = vector.extract_strided_slice %143 {offsets = [0, 96], sizes = [2, 32], strides = [1, 1]} : vector<2x128xf32> to vector<2x32xf32>
    %148 = arith.mulf %145, %111 : vector<2x32xf32>
    %149 = arith.mulf %144, %146 : vector<2x32xf32>
    %150 = arith.addf %148, %149 : vector<2x32xf32>
    %151 = math.tanh %150 : vector<2x32xf32>
    %152 = arith.mulf %147, %151 : vector<2x32xf32>
    %153 = vector.extract_strided_slice %58 {offsets = [4, 0], sizes = [2, 128], strides = [1, 1]} : vector<16x128xf32> to vector<2x128xf32>
    %cst_59 = arith.constant dense<0.000000e+00> : vector<2x128xf32>
    %154 = tpu.matmul %132, %1, %cst_59 {dimension_numbers = #tpu.dot_dimension_numbers<[1], [0], [0], [1], [0, 0, 1, 1], [], []>} : vector<2x32xf32>, vector<32x128xf32>, vector<2x128xf32> -> vector<2x128xf32>
    %155 = arith.addf %153, %154 : vector<2x128xf32>
    %156 = vector.broadcast %67 : vector<1x128xf32> to vector<2x128xf32>
    %157 = arith.mulf %155, %156 : vector<2x128xf32>
    %158 = math.tanh %157 : vector<2x128xf32>
    %159 = vector.broadcast %70 : vector<1x128xf32> to vector<2x128xf32>
    %160 = arith.mulf %158, %159 : vector<2x128xf32>
    %161 = vector.broadcast %73 : vector<1x128xf32> to vector<2x128xf32>
    %162 = arith.addf %160, %161 : vector<2x128xf32>
    %163 = vector.extract_strided_slice %162 {offsets = [0, 0], sizes = [2, 32], strides = [1, 1]} : vector<2x128xf32> to vector<2x32xf32>
    %164 = vector.extract_strided_slice %162 {offsets = [0, 32], sizes = [2, 32], strides = [1, 1]} : vector<2x128xf32> to vector<2x32xf32>
    %165 = vector.extract_strided_slice %162 {offsets = [0, 64], sizes = [2, 32], strides = [1, 1]} : vector<2x128xf32> to vector<2x32xf32>
    %166 = vector.extract_strided_slice %162 {offsets = [0, 96], sizes = [2, 32], strides = [1, 1]} : vector<2x128xf32> to vector<2x32xf32>
    %167 = arith.mulf %164, %130 : vector<2x32xf32>
    %168 = arith.mulf %163, %165 : vector<2x32xf32>
    %169 = arith.addf %167, %168 : vector<2x32xf32>
    %170 = math.tanh %169 : vector<2x32xf32>
    %171 = arith.mulf %166, %170 : vector<2x32xf32>
    %172 = tpu.concatenate %171, %152 in 1 : vector<2x32xf32>, vector<2x32xf32> -> vector<2x64xf32>
    %cst_60 = arith.constant dense<0.000000e+00> : vector<2x128xf32>
    %173 = tpu.matmul %172, %3, %cst_60 {dimension_numbers = #tpu.dot_dimension_numbers<[1], [0], [0], [1], [0, 0, 1, 1], [], []>} : vector<2x64xf32>, vector<64x128xf32>, vector<2x128xf32> -> vector<2x128xf32>
    %174 = vector.broadcast %4 : vector<1x128xf32> to vector<2x128xf32>
    %175 = arith.addf %173, %174 : vector<2x128xf32>
    %176 = vector.broadcast %67 : vector<1x128xf32> to vector<2x128xf32>
    %177 = arith.mulf %175, %176 : vector<2x128xf32>
    %178 = math.tanh %177 : vector<2x128xf32>
    %179 = vector.broadcast %70 : vector<1x128xf32> to vector<2x128xf32>
    %180 = arith.mulf %178, %179 : vector<2x128xf32>
    %181 = vector.broadcast %73 : vector<1x128xf32> to vector<2x128xf32>
    %182 = arith.addf %180, %181 : vector<2x128xf32>
    %183 = vector.extract_strided_slice %182 {offsets = [0, 0], sizes = [2, 32], strides = [1, 1]} : vector<2x128xf32> to vector<2x32xf32>
    %184 = vector.extract_strided_slice %182 {offsets = [0, 32], sizes = [2, 32], strides = [1, 1]} : vector<2x128xf32> to vector<2x32xf32>
    %185 = vector.extract_strided_slice %182 {offsets = [0, 64], sizes = [2, 32], strides = [1, 1]} : vector<2x128xf32> to vector<2x32xf32>
    %186 = vector.extract_strided_slice %182 {offsets = [0, 96], sizes = [2, 32], strides = [1, 1]} : vector<2x128xf32> to vector<2x32xf32>
    %187 = arith.mulf %184, %150 : vector<2x32xf32>
    %188 = arith.mulf %183, %185 : vector<2x32xf32>
    %189 = arith.addf %187, %188 : vector<2x32xf32>
    %190 = math.tanh %189 : vector<2x32xf32>
    %191 = arith.mulf %186, %190 : vector<2x32xf32>
    %192 = vector.extract_strided_slice %58 {offsets = [6, 0], sizes = [2, 128], strides = [1, 1]} : vector<16x128xf32> to vector<2x128xf32>
    %cst_61 = arith.constant dense<0.000000e+00> : vector<2x128xf32>
    %193 = tpu.matmul %171, %1, %cst_61 {dimension_numbers = #tpu.dot_dimension_numbers<[1], [0], [0], [1], [0, 0, 1, 1], [], []>} : vector<2x32xf32>, vector<32x128xf32>, vector<2x128xf32> -> vector<2x128xf32>
    %194 = arith.addf %192, %193 : vector<2x128xf32>
    %195 = vector.broadcast %67 : vector<1x128xf32> to vector<2x128xf32>
    %196 = arith.mulf %194, %195 : vector<2x128xf32>
    %197 = math.tanh %196 : vector<2x128xf32>
    %198 = vector.broadcast %70 : vector<1x128xf32> to vector<2x128xf32>
    %199 = arith.mulf %197, %198 : vector<2x128xf32>
    %200 = vector.broadcast %73 : vector<1x128xf32> to vector<2x128xf32>
    %201 = arith.addf %199, %200 : vector<2x128xf32>
    %202 = vector.extract_strided_slice %201 {offsets = [0, 0], sizes = [2, 32], strides = [1, 1]} : vector<2x128xf32> to vector<2x32xf32>
    %203 = vector.extract_strided_slice %201 {offsets = [0, 32], sizes = [2, 32], strides = [1, 1]} : vector<2x128xf32> to vector<2x32xf32>
    %204 = vector.extract_strided_slice %201 {offsets = [0, 64], sizes = [2, 32], strides = [1, 1]} : vector<2x128xf32> to vector<2x32xf32>
    %205 = vector.extract_strided_slice %201 {offsets = [0, 96], sizes = [2, 32], strides = [1, 1]} : vector<2x128xf32> to vector<2x32xf32>
    %206 = arith.mulf %203, %169 : vector<2x32xf32>
    %207 = arith.mulf %202, %204 : vector<2x32xf32>
    %208 = arith.addf %206, %207 : vector<2x32xf32>
    %209 = math.tanh %208 : vector<2x32xf32>
    %210 = arith.mulf %205, %209 : vector<2x32xf32>
    %211 = tpu.concatenate %210, %191 in 1 : vector<2x32xf32>, vector<2x32xf32> -> vector<2x64xf32>
    %cst_62 = arith.constant dense<0.000000e+00> : vector<2x128xf32>
    %212 = tpu.matmul %211, %3, %cst_62 {dimension_numbers = #tpu.dot_dimension_numbers<[1], [0], [0], [1], [0, 0, 1, 1], [], []>} : vector<2x64xf32>, vector<64x128xf32>, vector<2x128xf32> -> vector<2x128xf32>
    %213 = vector.broadcast %4 : vector<1x128xf32> to vector<2x128xf32>
    %214 = arith.addf %212, %213 : vector<2x128xf32>
    %215 = vector.broadcast %67 : vector<1x128xf32> to vector<2x128xf32>
    %216 = arith.mulf %214, %215 : vector<2x128xf32>
    %217 = math.tanh %216 : vector<2x128xf32>
    %218 = vector.broadcast %70 : vector<1x128xf32> to vector<2x128xf32>
    %219 = arith.mulf %217, %218 : vector<2x128xf32>
    %220 = vector.broadcast %73 : vector<1x128xf32> to vector<2x128xf32>
    %221 = arith.addf %219, %220 : vector<2x128xf32>
    %222 = vector.extract_strided_slice %221 {offsets = [0, 0], sizes = [2, 32], strides = [1, 1]} : vector<2x128xf32> to vector<2x32xf32>
    %223 = vector.extract_strided_slice %221 {offsets = [0, 32], sizes = [2, 32], strides = [1, 1]} : vector<2x128xf32> to vector<2x32xf32>
    %224 = vector.extract_strided_slice %221 {offsets = [0, 64], sizes = [2, 32], strides = [1, 1]} : vector<2x128xf32> to vector<2x32xf32>
    %225 = vector.extract_strided_slice %221 {offsets = [0, 96], sizes = [2, 32], strides = [1, 1]} : vector<2x128xf32> to vector<2x32xf32>
    %226 = arith.mulf %223, %189 : vector<2x32xf32>
    %227 = arith.mulf %222, %224 : vector<2x32xf32>
    %228 = arith.addf %226, %227 : vector<2x32xf32>
    %229 = math.tanh %228 : vector<2x32xf32>
    %230 = arith.mulf %225, %229 : vector<2x32xf32>
    %231 = vector.extract_strided_slice %58 {offsets = [8, 0], sizes = [2, 128], strides = [1, 1]} : vector<16x128xf32> to vector<2x128xf32>
    %cst_63 = arith.constant dense<0.000000e+00> : vector<2x128xf32>
    %232 = tpu.matmul %210, %1, %cst_63 {dimension_numbers = #tpu.dot_dimension_numbers<[1], [0], [0], [1], [0, 0, 1, 1], [], []>} : vector<2x32xf32>, vector<32x128xf32>, vector<2x128xf32> -> vector<2x128xf32>
    %233 = arith.addf %231, %232 : vector<2x128xf32>
    %234 = vector.broadcast %67 : vector<1x128xf32> to vector<2x128xf32>
    %235 = arith.mulf %233, %234 : vector<2x128xf32>
    %236 = math.tanh %235 : vector<2x128xf32>
    %237 = vector.broadcast %70 : vector<1x128xf32> to vector<2x128xf32>
    %238 = arith.mulf %236, %237 : vector<2x128xf32>
    %239 = vector.broadcast %73 : vector<1x128xf32> to vector<2x128xf32>
    %240 = arith.addf %238, %239 : vector<2x128xf32>
    %241 = vector.extract_strided_slice %240 {offsets = [0, 0], sizes = [2, 32], strides = [1, 1]} : vector<2x128xf32> to vector<2x32xf32>
    %242 = vector.extract_strided_slice %240 {offsets = [0, 32], sizes = [2, 32], strides = [1, 1]} : vector<2x128xf32> to vector<2x32xf32>
    %243 = vector.extract_strided_slice %240 {offsets = [0, 64], sizes = [2, 32], strides = [1, 1]} : vector<2x128xf32> to vector<2x32xf32>
    %244 = vector.extract_strided_slice %240 {offsets = [0, 96], sizes = [2, 32], strides = [1, 1]} : vector<2x128xf32> to vector<2x32xf32>
    %245 = arith.mulf %242, %208 : vector<2x32xf32>
    %246 = arith.mulf %241, %243 : vector<2x32xf32>
    %247 = arith.addf %245, %246 : vector<2x32xf32>
    %248 = math.tanh %247 : vector<2x32xf32>
    %249 = arith.mulf %244, %248 : vector<2x32xf32>
    %250 = tpu.concatenate %249, %230 in 1 : vector<2x32xf32>, vector<2x32xf32> -> vector<2x64xf32>
    %cst_64 = arith.constant dense<0.000000e+00> : vector<2x128xf32>
    %251 = tpu.matmul %250, %3, %cst_64 {dimension_numbers = #tpu.dot_dimension_numbers<[1], [0], [0], [1], [0, 0, 1, 1], [], []>} : vector<2x64xf32>, vector<64x128xf32>, vector<2x128xf32> -> vector<2x128xf32>
    %252 = vector.broadcast %4 : vector<1x128xf32> to vector<2x128xf32>
    %253 = arith.addf %251, %252 : vector<2x128xf32>
    %254 = vector.broadcast %67 : vector<1x128xf32> to vector<2x128xf32>
    %255 = arith.mulf %253, %254 : vector<2x128xf32>
    %256 = math.tanh %255 : vector<2x128xf32>
    %257 = vector.broadcast %70 : vector<1x128xf32> to vector<2x128xf32>
    %258 = arith.mulf %256, %257 : vector<2x128xf32>
    %259 = vector.broadcast %73 : vector<1x128xf32> to vector<2x128xf32>
    %260 = arith.addf %258, %259 : vector<2x128xf32>
    %261 = vector.extract_strided_slice %260 {offsets = [0, 0], sizes = [2, 32], strides = [1, 1]} : vector<2x128xf32> to vector<2x32xf32>
    %262 = vector.extract_strided_slice %260 {offsets = [0, 32], sizes = [2, 32], strides = [1, 1]} : vector<2x128xf32> to vector<2x32xf32>
    %263 = vector.extract_strided_slice %260 {offsets = [0, 64], sizes = [2, 32], strides = [1, 1]} : vector<2x128xf32> to vector<2x32xf32>
    %264 = vector.extract_strided_slice %260 {offsets = [0, 96], sizes = [2, 32], strides = [1, 1]} : vector<2x128xf32> to vector<2x32xf32>
    %265 = arith.mulf %262, %228 : vector<2x32xf32>
    %266 = arith.mulf %261, %263 : vector<2x32xf32>
    %267 = arith.addf %265, %266 : vector<2x32xf32>
    %268 = math.tanh %267 : vector<2x32xf32>
    %269 = arith.mulf %264, %268 : vector<2x32xf32>
    %270 = vector.extract_strided_slice %58 {offsets = [10, 0], sizes = [2, 128], strides = [1, 1]} : vector<16x128xf32> to vector<2x128xf32>
    %cst_65 = arith.constant dense<0.000000e+00> : vector<2x128xf32>
    %271 = tpu.matmul %249, %1, %cst_65 {dimension_numbers = #tpu.dot_dimension_numbers<[1], [0], [0], [1], [0, 0, 1, 1], [], []>} : vector<2x32xf32>, vector<32x128xf32>, vector<2x128xf32> -> vector<2x128xf32>
    %272 = arith.addf %270, %271 : vector<2x128xf32>
    %273 = vector.broadcast %67 : vector<1x128xf32> to vector<2x128xf32>
    %274 = arith.mulf %272, %273 : vector<2x128xf32>
    %275 = math.tanh %274 : vector<2x128xf32>
    %276 = vector.broadcast %70 : vector<1x128xf32> to vector<2x128xf32>
    %277 = arith.mulf %275, %276 : vector<2x128xf32>
    %278 = vector.broadcast %73 : vector<1x128xf32> to vector<2x128xf32>
    %279 = arith.addf %277, %278 : vector<2x128xf32>
    %280 = vector.extract_strided_slice %279 {offsets = [0, 0], sizes = [2, 32], strides = [1, 1]} : vector<2x128xf32> to vector<2x32xf32>
    %281 = vector.extract_strided_slice %279 {offsets = [0, 32], sizes = [2, 32], strides = [1, 1]} : vector<2x128xf32> to vector<2x32xf32>
    %282 = vector.extract_strided_slice %279 {offsets = [0, 64], sizes = [2, 32], strides = [1, 1]} : vector<2x128xf32> to vector<2x32xf32>
    %283 = vector.extract_strided_slice %279 {offsets = [0, 96], sizes = [2, 32], strides = [1, 1]} : vector<2x128xf32> to vector<2x32xf32>
    %284 = arith.mulf %281, %247 : vector<2x32xf32>
    %285 = arith.mulf %280, %282 : vector<2x32xf32>
    %286 = arith.addf %284, %285 : vector<2x32xf32>
    %287 = math.tanh %286 : vector<2x32xf32>
    %288 = arith.mulf %283, %287 : vector<2x32xf32>
    %289 = tpu.concatenate %288, %269 in 1 : vector<2x32xf32>, vector<2x32xf32> -> vector<2x64xf32>
    %cst_66 = arith.constant dense<0.000000e+00> : vector<2x128xf32>
    %290 = tpu.matmul %289, %3, %cst_66 {dimension_numbers = #tpu.dot_dimension_numbers<[1], [0], [0], [1], [0, 0, 1, 1], [], []>} : vector<2x64xf32>, vector<64x128xf32>, vector<2x128xf32> -> vector<2x128xf32>
    %291 = vector.broadcast %4 : vector<1x128xf32> to vector<2x128xf32>
    %292 = arith.addf %290, %291 : vector<2x128xf32>
    %293 = vector.broadcast %67 : vector<1x128xf32> to vector<2x128xf32>
    %294 = arith.mulf %292, %293 : vector<2x128xf32>
    %295 = math.tanh %294 : vector<2x128xf32>
    %296 = vector.broadcast %70 : vector<1x128xf32> to vector<2x128xf32>
    %297 = arith.mulf %295, %296 : vector<2x128xf32>
    %298 = vector.broadcast %73 : vector<1x128xf32> to vector<2x128xf32>
    %299 = arith.addf %297, %298 : vector<2x128xf32>
    %300 = vector.extract_strided_slice %299 {offsets = [0, 0], sizes = [2, 32], strides = [1, 1]} : vector<2x128xf32> to vector<2x32xf32>
    %301 = vector.extract_strided_slice %299 {offsets = [0, 32], sizes = [2, 32], strides = [1, 1]} : vector<2x128xf32> to vector<2x32xf32>
    %302 = vector.extract_strided_slice %299 {offsets = [0, 64], sizes = [2, 32], strides = [1, 1]} : vector<2x128xf32> to vector<2x32xf32>
    %303 = vector.extract_strided_slice %299 {offsets = [0, 96], sizes = [2, 32], strides = [1, 1]} : vector<2x128xf32> to vector<2x32xf32>
    %304 = arith.mulf %301, %267 : vector<2x32xf32>
    %305 = arith.mulf %300, %302 : vector<2x32xf32>
    %306 = arith.addf %304, %305 : vector<2x32xf32>
    %307 = math.tanh %306 : vector<2x32xf32>
    %308 = arith.mulf %303, %307 : vector<2x32xf32>
    %309 = vector.extract_strided_slice %58 {offsets = [12, 0], sizes = [2, 128], strides = [1, 1]} : vector<16x128xf32> to vector<2x128xf32>
    %cst_67 = arith.constant dense<0.000000e+00> : vector<2x128xf32>
    %310 = tpu.matmul %288, %1, %cst_67 {dimension_numbers = #tpu.dot_dimension_numbers<[1], [0], [0], [1], [0, 0, 1, 1], [], []>} : vector<2x32xf32>, vector<32x128xf32>, vector<2x128xf32> -> vector<2x128xf32>
    %311 = arith.addf %309, %310 : vector<2x128xf32>
    %312 = vector.broadcast %67 : vector<1x128xf32> to vector<2x128xf32>
    %313 = arith.mulf %311, %312 : vector<2x128xf32>
    %314 = math.tanh %313 : vector<2x128xf32>
    %315 = vector.broadcast %70 : vector<1x128xf32> to vector<2x128xf32>
    %316 = arith.mulf %314, %315 : vector<2x128xf32>
    %317 = vector.broadcast %73 : vector<1x128xf32> to vector<2x128xf32>
    %318 = arith.addf %316, %317 : vector<2x128xf32>
    %319 = vector.extract_strided_slice %318 {offsets = [0, 0], sizes = [2, 32], strides = [1, 1]} : vector<2x128xf32> to vector<2x32xf32>
    %320 = vector.extract_strided_slice %318 {offsets = [0, 32], sizes = [2, 32], strides = [1, 1]} : vector<2x128xf32> to vector<2x32xf32>
    %321 = vector.extract_strided_slice %318 {offsets = [0, 64], sizes = [2, 32], strides = [1, 1]} : vector<2x128xf32> to vector<2x32xf32>
    %322 = vector.extract_strided_slice %318 {offsets = [0, 96], sizes = [2, 32], strides = [1, 1]} : vector<2x128xf32> to vector<2x32xf32>
    %323 = arith.mulf %320, %286 : vector<2x32xf32>
    %324 = arith.mulf %319, %321 : vector<2x32xf32>
    %325 = arith.addf %323, %324 : vector<2x32xf32>
    %326 = math.tanh %325 : vector<2x32xf32>
    %327 = arith.mulf %322, %326 : vector<2x32xf32>
    %328 = tpu.concatenate %327, %308 in 1 : vector<2x32xf32>, vector<2x32xf32> -> vector<2x64xf32>
    %cst_68 = arith.constant dense<0.000000e+00> : vector<2x128xf32>
    %329 = tpu.matmul %328, %3, %cst_68 {dimension_numbers = #tpu.dot_dimension_numbers<[1], [0], [0], [1], [0, 0, 1, 1], [], []>} : vector<2x64xf32>, vector<64x128xf32>, vector<2x128xf32> -> vector<2x128xf32>
    %330 = vector.broadcast %4 : vector<1x128xf32> to vector<2x128xf32>
    %331 = arith.addf %329, %330 : vector<2x128xf32>
    %332 = vector.broadcast %67 : vector<1x128xf32> to vector<2x128xf32>
    %333 = arith.mulf %331, %332 : vector<2x128xf32>
    %334 = math.tanh %333 : vector<2x128xf32>
    %335 = vector.broadcast %70 : vector<1x128xf32> to vector<2x128xf32>
    %336 = arith.mulf %334, %335 : vector<2x128xf32>
    %337 = vector.broadcast %73 : vector<1x128xf32> to vector<2x128xf32>
    %338 = arith.addf %336, %337 : vector<2x128xf32>
    %339 = vector.extract_strided_slice %338 {offsets = [0, 0], sizes = [2, 32], strides = [1, 1]} : vector<2x128xf32> to vector<2x32xf32>
    %340 = vector.extract_strided_slice %338 {offsets = [0, 32], sizes = [2, 32], strides = [1, 1]} : vector<2x128xf32> to vector<2x32xf32>
    %341 = vector.extract_strided_slice %338 {offsets = [0, 64], sizes = [2, 32], strides = [1, 1]} : vector<2x128xf32> to vector<2x32xf32>
    %342 = vector.extract_strided_slice %338 {offsets = [0, 96], sizes = [2, 32], strides = [1, 1]} : vector<2x128xf32> to vector<2x32xf32>
    %343 = arith.mulf %340, %306 : vector<2x32xf32>
    %344 = arith.mulf %339, %341 : vector<2x32xf32>
    %345 = arith.addf %343, %344 : vector<2x32xf32>
    %346 = math.tanh %345 : vector<2x32xf32>
    %347 = arith.mulf %342, %346 : vector<2x32xf32>
    %348 = vector.extract_strided_slice %58 {offsets = [14, 0], sizes = [2, 128], strides = [1, 1]} : vector<16x128xf32> to vector<2x128xf32>
    %cst_69 = arith.constant dense<0.000000e+00> : vector<2x128xf32>
    %349 = tpu.matmul %327, %1, %cst_69 {dimension_numbers = #tpu.dot_dimension_numbers<[1], [0], [0], [1], [0, 0, 1, 1], [], []>} : vector<2x32xf32>, vector<32x128xf32>, vector<2x128xf32> -> vector<2x128xf32>
    %350 = arith.addf %348, %349 : vector<2x128xf32>
    %351 = vector.broadcast %67 : vector<1x128xf32> to vector<2x128xf32>
    %352 = arith.mulf %350, %351 : vector<2x128xf32>
    %353 = math.tanh %352 : vector<2x128xf32>
    %354 = vector.broadcast %70 : vector<1x128xf32> to vector<2x128xf32>
    %355 = arith.mulf %353, %354 : vector<2x128xf32>
    %356 = vector.broadcast %73 : vector<1x128xf32> to vector<2x128xf32>
    %357 = arith.addf %355, %356 : vector<2x128xf32>
    %358 = vector.extract_strided_slice %357 {offsets = [0, 0], sizes = [2, 32], strides = [1, 1]} : vector<2x128xf32> to vector<2x32xf32>
    %359 = vector.extract_strided_slice %357 {offsets = [0, 32], sizes = [2, 32], strides = [1, 1]} : vector<2x128xf32> to vector<2x32xf32>
    %360 = vector.extract_strided_slice %357 {offsets = [0, 64], sizes = [2, 32], strides = [1, 1]} : vector<2x128xf32> to vector<2x32xf32>
    %361 = vector.extract_strided_slice %357 {offsets = [0, 96], sizes = [2, 32], strides = [1, 1]} : vector<2x128xf32> to vector<2x32xf32>
    %362 = arith.mulf %359, %325 : vector<2x32xf32>
    %363 = arith.mulf %358, %360 : vector<2x32xf32>
    %364 = arith.addf %362, %363 : vector<2x32xf32>
    %365 = math.tanh %364 : vector<2x32xf32>
    %366 = arith.mulf %361, %365 : vector<2x32xf32>
    %367 = tpu.concatenate %366, %347 in 1 : vector<2x32xf32>, vector<2x32xf32> -> vector<2x64xf32>
    %cst_70 = arith.constant dense<0.000000e+00> : vector<2x128xf32>
    %368 = tpu.matmul %367, %3, %cst_70 {dimension_numbers = #tpu.dot_dimension_numbers<[1], [0], [0], [1], [0, 0, 1, 1], [], []>} : vector<2x64xf32>, vector<64x128xf32>, vector<2x128xf32> -> vector<2x128xf32>
    %369 = vector.broadcast %4 : vector<1x128xf32> to vector<2x128xf32>
    %370 = arith.addf %368, %369 : vector<2x128xf32>
    %371 = vector.broadcast %67 : vector<1x128xf32> to vector<2x128xf32>
    %372 = arith.mulf %370, %371 : vector<2x128xf32>
    %373 = math.tanh %372 : vector<2x128xf32>
    %374 = vector.broadcast %70 : vector<1x128xf32> to vector<2x128xf32>
    %375 = arith.mulf %373, %374 : vector<2x128xf32>
    %376 = vector.broadcast %73 : vector<1x128xf32> to vector<2x128xf32>
    %377 = arith.addf %375, %376 : vector<2x128xf32>
    %378 = vector.extract_strided_slice %377 {offsets = [0, 0], sizes = [2, 32], strides = [1, 1]} : vector<2x128xf32> to vector<2x32xf32>
    %379 = vector.extract_strided_slice %377 {offsets = [0, 32], sizes = [2, 32], strides = [1, 1]} : vector<2x128xf32> to vector<2x32xf32>
    %380 = vector.extract_strided_slice %377 {offsets = [0, 64], sizes = [2, 32], strides = [1, 1]} : vector<2x128xf32> to vector<2x32xf32>
    %381 = vector.extract_strided_slice %377 {offsets = [0, 96], sizes = [2, 32], strides = [1, 1]} : vector<2x128xf32> to vector<2x32xf32>
    %382 = arith.mulf %379, %345 : vector<2x32xf32>
    %383 = arith.mulf %378, %380 : vector<2x32xf32>
    %384 = arith.addf %382, %383 : vector<2x32xf32>
    %385 = math.tanh %384 : vector<2x32xf32>
    %386 = arith.mulf %381, %385 : vector<2x32xf32>
    %387 = tpu.concatenate %113, %152, %191, %230, %269, %308, %347, %386 in 0 : vector<2x32xf32>, vector<2x32xf32>, vector<2x32xf32>, vector<2x32xf32>, vector<2x32xf32>, vector<2x32xf32>, vector<2x32xf32>, vector<2x32xf32> -> vector<16x32xf32>
    %cst_71 = arith.constant dense<0.000000e+00> : vector<16x128xf32>
    %388 = tpu.matmul %387, %5, %cst_71 {dimension_numbers = #tpu.dot_dimension_numbers<[1], [0], [0], [1], [0, 0, 1, 1], [], []>} : vector<16x32xf32>, vector<32x128xf32>, vector<16x128xf32> -> vector<16x128xf32>
    %389 = vector.broadcast %6 : vector<1x128xf32> to vector<16x128xf32>
    %390 = arith.addf %388, %389 : vector<16x128xf32>
    %c0_72 = arith.constant 0 : index
    %c0_73 = arith.constant 0 : index
    %391 = vector.load %arg3[%c0_72, %c0_73] : memref<16x128xf32, #tpu.memory_space<vmem>>, vector<16x128xf32>
    tpu.vector_store %arg3[%c0_72, %c0_73], %390 {strides = array<i32>} : memref<16x128xf32, #tpu.memory_space<vmem>>, vector<16x128xf32>,
    return
  }
}

</mosaic_0001>

<llo_original>
// kernel: forward.1
$region0: #{forward.1}
  #allocation0 [shape = 'u32[]', space=smem, size = 0x4, offset = 0x4, fixed_abs, tag = 'smem constant byte address 0x4 - core index']
  #allocation1 [shape = 'u32[144,128]{1,0:T(1,128)}', space=vmem, size = 0x12000, scoped, tag = 'internal scratch']
  %s0 = inlined_call_operand.vmem [shape: s32[2,8], index: 0, kind: input, shape index: {}]
  %s1 = inlined_call_operand.vmem [shape: f32[65,32], index: 1, kind: input, shape index: {}]
  %s2 = inlined_call_operand.hbm [shape: f32[184,128], index: 2, kind: input, shape index: {}]
  %s3 = inlined_call_operand.vmem [shape: f32[16,128], index: 3, kind: output, shape index: {}]
  %s4 = sld [smem:[#allocation0]]
  $region30: #{forward.1} parent=0
    _
  %s6 = ssub.s32 1, %s4
  %s7 = scalar_select 0, %s6, %s4
  $region1: #{forward.1} parent=0
    #allocation2 [shape = 'u8[1024]{0}', space=smem, size = 0x400, scoped, tag = 'input window, operand 0, single buffered']
    #allocation3 [shape = 's32[1]{0}', space=sflag, size = 0x4, scoped, tag = 'scoped memory for forward.1']
    #allocation4 [shape = 's32[1]{0}', space=sflag, size = 0x4, scoped, tag = 'scoped memory for forward.1']
    #allocation5 [shape = 'u8[94208]{0}', space=vmem, size = 0x17000, scoped, tag = 'input window, operand 2, single buffered']
    %8 = vsyncpa [#allocation4], 0
    %9 = vsyncpa [#allocation3], 0
    // Predicated region
    $region2: #{forward.1} parent=1 // pred_check
      _
    $region3: #{forward.1} parent=1 // pred_check_branch
      %11 = sbr.rel (0) target = $region5
    $region4: #{forward.1} parent=1 // pred_region
      %s13 = ssub.s32 32, 32
      %14 = vsyncadd [#allocation4], %s13
      %s16 = sshll.u32 %s0, 4
      %s17 = int_to_ptr.vmem [resolvable:$true] %s16
      %19 = dma.vmem_to_smem %s17, 32, [#allocation2], [#allocation4]
    $region5: #{forward.1} parent=1 // pred_fallthru
      _
    // Predicated region
    $region6: #{forward.1} parent=1 // pred_check
      _
    $region7: #{forward.1} parent=1 // pred_check_branch
      %21 = sbr.rel (0) target = $region9
    $region8: #{forward.1} parent=1 // pred_region
      _
    $region9: #{forward.1} parent=1 // pred_fallthru
      _
    // Predicated region
    $region10: #{forward.1} parent=1 // pred_check
      _
    $region11: #{forward.1} parent=1 // pred_check_branch
      %23 = sbr.rel (0) target = $region13
    $region12: #{forward.1} parent=1 // pred_region
      %s25 = ssub.s32 2944, 2944
      %26 = vsyncadd [#allocation3], %s25
      %s27 = sshll.u32 [#allocation5], 4
      %s28 = int_to_ptr.vmem [resolvable:$true] %s27
      %33 = dma.hbm_to_vmem [thread:$0]  %s2, 2944, %s28, [#allocation3], 128, 128, 8
    $region13: #{forward.1} parent=1 // pred_fallthru
      _
    // Predicated region
    $region14: #{forward.1} parent=1 // pred_check
      _
    $region15: #{forward.1} parent=1 // pred_check_branch
      %35 = sbr.rel (0) target = $region17
    $region16: #{forward.1} parent=1 // pred_region
      %36 = dma.done [#allocation4], 32
    $region17: #{forward.1} parent=1 // pred_fallthru
      _
    // Predicated region
    $region18: #{forward.1} parent=1 // pred_check
      _
    $region19: #{forward.1} parent=1 // pred_check_branch
      %38 = sbr.rel (0) target = $region21
    $region20: #{forward.1} parent=1 // pred_region
      %39 = dma.done [#allocation3], 2944
    $region21: #{forward.1} parent=1 // pred_fallthru
      _
    %40 = sfence
    %v41 = vld [vmem:[#allocation5] sm:$0xff]
    %v42 = vld [vmem:[#allocation5 + $0x8] sm:$0xff]
    %v43 = vld [vmem:[#allocation5 + $0x10] sm:$0xff]
    %v44 = vld [vmem:[#allocation5 + $0x18] sm:$0xff]
    %v45 = vld [vmem:[#allocation5 + $0x20] sm:$0xff]
    %v46 = vld [vmem:[#allocation5 + $0x28] sm:$0xff]
    %v47 = vld [vmem:[#allocation5 + $0x30] sm:$0xff]
    %v48 = vld [vmem:[#allocation5 + $0x38] sm:$0xff]
    %v49 = vld [vmem:[#allocation5 + $0x40] sm:$0x1]
    %v50 = vld [vmem:[#allocation5 + $0x48] sm:$0xff]
    %v51 = vld [vmem:[#allocation5 + $0x50] sm:$0xff]
    %v52 = vld [vmem:[#allocation5 + $0x58] sm:$0xff]
    %v53 = vld [vmem:[#allocation5 + $0x60] sm:$0xff]
    %v54 = vld [vmem:[#allocation5 + $0x68] sm:$0xff]
    %v55 = vld [vmem:[#allocation5 + $0x70] sm:$0xff]
    %v56 = vld [vmem:[#allocation5 + $0x78] sm:$0xff]
    %v57 = vld [vmem:[#allocation5 + $0x80] sm:$0xff]
    %v58 = vld [vmem:[#allocation5 + $0x88] sm:$0x1]
    %v59 = vld [vmem:[#allocation5 + $0x90] sm:$0xff]
    %v60 = vld [vmem:[#allocation5 + $0x98] sm:$0xff]
    %v61 = vld [vmem:[#allocation5 + $0xa0] sm:$0xff]
    %v62 = vld [vmem:[#allocation5 + $0xa8] sm:$0xff]
    %v63 = vld [vmem:[#allocation5 + $0xb0] sm:$0x1]
    %s64 = sld [smem:[#allocation2]]
    %s65 = scalar_lea.vmem %s1, %s64
    %v66 = vld [vmem:[%s65] sm:$0x1]
    %s67 = sld [smem:[#allocation2 + $0x80]]
    %s68 = scalar_lea.vmem %s1, %s67
    %v69 = vld [vmem:[%s68] sm:$0x1]
    %s70 = sld [smem:[#allocation2 + $0x1]]
    %s71 = scalar_lea.vmem %s1, %s70
    %v72 = vld [vmem:[%s71] sm:$0x1]
    %s73 = sld [smem:[#allocation2 + $0x81]]
    %s74 = scalar_lea.vmem %s1, %s73
    %v75 = vld [vmem:[%s74] sm:$0x1]
    %s76 = sld [smem:[#allocation2 + $0x2]]
    %s77 = scalar_lea.vmem %s1, %s76
    %v78 = vld [vmem:[%s77] sm:$0x1]
    %s79 = sld [smem:[#allocation2 + $0x82]]
    %s80 = scalar_lea.vmem %s1, %s79
    %v81 = vld [vmem:[%s80] sm:$0x1]
    %s82 = sld [smem:[#allocation2 + $0x3]]
    %s83 = scalar_lea.vmem %s1, %s82
    %v84 = vld [vmem:[%s83] sm:$0x1]
    %s85 = sld [smem:[#allocation2 + $0x83]]
    %s86 = scalar_lea.vmem %s1, %s85
    %v87 = vld [vmem:[%s86] sm:$0x1]
    %s88 = sld [smem:[#allocation2 + $0x4]]
    %s89 = scalar_lea.vmem %s1, %s88
    %v90 = vld [vmem:[%s89] sm:$0x1]
    %s91 = sld [smem:[#allocation2 + $0x84]]
    %s92 = scalar_lea.vmem %s1, %s91
    %v93 = vld [vmem:[%s92] sm:$0x1]
    %s94 = sld [smem:[#allocation2 + $0x5]]
    %s95 = scalar_lea.vmem %s1, %s94
    %v96 = vld [vmem:[%s95] sm:$0x1]
    %s97 = sld [smem:[#allocation2 + $0x85]]
    %s98 = scalar_lea.vmem %s1, %s97
    %v99 = vld [vmem:[%s98] sm:$0x1]
    %s100 = sld [smem:[#allocation2 + $0x6]]
    %s101 = scalar_lea.vmem %s1, %s100
    %v102 = vld [vmem:[%s101] sm:$0x1]
    %s103 = sld [smem:[#allocation2 + $0x86]]
    %s104 = scalar_lea.vmem %s1, %s103
    %v105 = vld [vmem:[%s104] sm:$0x1]
    %s106 = sld [smem:[#allocation2 + $0x7]]
    %s107 = scalar_lea.vmem %s1, %s106
    %v108 = vld [vmem:[%s107] sm:$0x1]
    %s109 = sld [smem:[#allocation2 + $0x87]]
    %s110 = scalar_lea.vmem %s1, %s109
    %v111 = vld [vmem:[%s110] sm:$0x1]
    %v113 = vrot.slane %v69, 7
    %v116 = vrot.slane %v72, 6
    %v119 = vrot.slane %v75, 5
    %v122 = vrot.slane %v78, 4
    %v125 = vrot.slane %v81, 3
    %v128 = vrot.slane %v84, 2
    %v131 = vrot.slane %v87, 1
    %v134 = vrot.slane %v93, 7
    %v137 = vrot.slane %v96, 6
    %v140 = vrot.slane %v99, 5
    %v143 = vrot.slane %v102, 4
    %v146 = vrot.slane %v105, 3
    %v149 = vrot.slane %v108, 2
    %v152 = vrot.slane %v111, 1
    %vm154 = vcmask 1040384
    %v155 = vsel %vm154, %v66, %v113
    %vm156 = vcmask 1041408
    %v157 = vsel %vm156, %v155, %v116
    %vm158 = vcmask 1042432
    %v159 = vsel %vm158, %v157, %v119
    %vm160 = vcmask 1043456
    %v161 = vsel %vm160, %v159, %v122
    %vm162 = vcmask 1044480
    %v163 = vsel %vm162, %v161, %v125
    %vm164 = vcmask 1045504
    %v165 = vsel %vm164, %v163, %v128
    %vm166 = vcmask 1046528
    %v167 = vsel %vm166, %v165, %v131
    %v168 = vsel %vm154, %v90, %v134
    %v169 = vsel %vm156, %v168, %v137
    %v170 = vsel %vm158, %v169, %v140
    %v171 = vsel %vm160, %v170, %v143
    %v172 = vsel %vm162, %v171, %v146
    %v173 = vsel %vm164, %v172, %v149
    %v174 = vsel %vm166, %v173, %v152
    %v175 = vlaneseq
    %v176 = vshrl.u32 %v175, 7
    %v177 = vsub.s32 0, %v176
    %v178 = vrot.slane %v49, %v177
    %vm179 = vcmask 261120
    %v181 = vsel %vm179, %v167, 0
    %v184 = vsel %vm179, %v174, 0
    %186 = vmatprep.subr.mxu0 0.0
    %187 = vmatpush1.msra.mxu0 %v41
    %188 = vmatprep.subr.mxu0 0.0
    %189 = vmatpush1.msra.mxu0 %v42
    %190 = vmatprep.subr.mxu0 0.0
    %191 = vmatpush1.msra.mxu0 %v43
    %192 = vmatprep.subr.mxu0 0.0
    %193 = vmatpush1.msra.mxu0 %v44
    %194 = vmatprep.subr.mxu0 0.0
    %195 = vmatpush1.msra.mxu0 0.0
    %196 = vmatprep.subr.mxu0 0.0
    %197 = vmatpush1.msra.mxu0 0.0
    %198 = vmatprep.subr.mxu0 0.0
    %199 = vmatpush1.msra.mxu0 0.0
    %200 = vmatprep.subr.mxu0 0.0
    %201 = vmatpush1.msra.mxu0 0.0
    %202 = vmatprep.subr.mxu0 0.0
    %203 = vmatpush1.msra.mxu0 0.0
    %204 = vmatprep.subr.mxu0 0.0
    %205 = vmatpush1.msra.mxu0 0.0
    %206 = vmatprep.subr.mxu0 0.0
    %207 = vmatpush1.msra.mxu0 0.0
    %208 = vmatprep.subr.mxu0 0.0
    %209 = vmatpush1.msra.mxu0 0.0
    %210 = vmatprep.subr.mxu0 0.0
    %211 = vmatpush1.msra.mxu0 0.0
    %212 = vmatprep.subr.mxu0 0.0
    %213 = vmatpush1.msra.mxu0 0.0
    %214 = vmatprep.subr.mxu0 0.0
    %215 = vmatpush1.msra.mxu0 0.0
    %216 = vmatprep.subr.mxu0 0.0
    %217 = vmatpush1.msra.mxu0 0.0
    %218 = vmatprep.subr.mxu0 0.0
    %219 = vmatpush1.msra.mxu0 0.0
    %220 = vmatprep.subr.mxu0 0.0
    %221 = vmatpush1.msra.mxu0 0.0
    %222 = vmatprep.subr.mxu0 0.0
    %223 = vmatpush1.msra.mxu0 0.0
    %224 = vmatprep.subr.mxu0 0.0
    %225 = vmatpush1.msra.mxu0 0.0
    %226 = vmatprep.subr.mxu0 0.0
    %227 = vmatpush1.msra.mxu0 0.0
    %228 = vmatprep.subr.mxu0 0.0
    %229 = vmatpush1.msra.mxu0 0.0
    %230 = vmatprep.subr.mxu0 0.0
    %231 = vmatpush1.msra.mxu0 0.0
    %232 = vmatprep.subr.mxu0 0.0
    %233 = vmatpush1.msra.mxu0 0.0
    %234 = vmatprep.subr.mxu0 0.0
    %235 = vmatpush1.msra.mxu0 0.0
    %236 = vmatprep.subr.mxu0 0.0
    %237 = vmatpush1.msra.mxu0 0.0
    %238 = vmatprep.subr.mxu0 0.0
    %239 = vmatpush1.msra.mxu0 0.0
    %240 = vmatprep.subr.mxu0 0.0
    %241 = vmatpush1.msra.mxu0 0.0
    %242 = vmatprep.subr.mxu0 0.0
    %243 = vmatpush1.msra.mxu0 0.0
    %244 = vmatprep.subr.mxu0 0.0
    %245 = vmatpush1.msra.mxu0 0.0
    %246 = vmatprep.subr.mxu0 0.0
    %247 = vmatpush1.msra.mxu0 0.0
    %248 = vmatprep.subr.mxu0 0.0
    %249 = vmatpush1.msra.mxu0 0.0
    %250 = vmatprep.mubr.f32.mxu0 0.0
    %251 = vmatmul.mubr.f32.gmra.mrb[0].mxu0 %v181
    %v252 = vpop.f32.mrb[0].mxu0
    %v253 = vadd.f32 %v178, %v252
    %v254 = vpop.f32.mrb[0].mxu0
    %255 = vmatprep.mubr.f32.mxu0 0.0
    %256 = vmatmul.mubr.f32.gmra.mrb[0].mxu0 %v184
    %v257 = vpop.f32.mrb[0].mxu0
    %v258 = vadd.f32 %v178, %v257
    %v259 = vpop.f32.mrb[0].mxu0
    %260 = vdwg.mxu0
    %v261 = vlaneseq
    %v262 = vand.u32 %v261, 127
    %vm263 = vcmp.ge.s32.totalorder %v262, 64
    %vm264 = vcmp.lt.s32.totalorder %v262, 96
    %vm265 = vmand %vm263, %vm264
    %v266 = vsel %vm265, 1.0, 0.5
    %v267 = vsel %vm265, 0.0, 0.5
    %v269 = vsel %vm179, 0.0, 0
    %271 = vmatprep.subr.mxu0 0.0
    %272 = vmatpush1.msra.mxu0 %v45
    %273 = vmatprep.subr.mxu0 0.0
    %274 = vmatpush1.msra.mxu0 %v46
    %275 = vmatprep.subr.mxu0 0.0
    %276 = vmatpush1.msra.mxu0 %v47
    %277 = vmatprep.subr.mxu0 0.0
    %278 = vmatpush1.msra.mxu0 %v48
    %279 = vmatprep.subr.mxu0 0.0
    %280 = vmatpush1.msra.mxu0 0.0
    %281 = vmatprep.subr.mxu0 0.0
    %282 = vmatpush1.msra.mxu0 0.0
    %283 = vmatprep.subr.mxu0 0.0
    %284 = vmatpush1.msra.mxu0 0.0
    %285 = vmatprep.subr.mxu0 0.0
    %286 = vmatpush1.msra.mxu0 0.0
    %287 = vmatprep.subr.mxu0 0.0
    %288 = vmatpush1.msra.mxu0 0.0
    %289 = vmatprep.subr.mxu0 0.0
    %290 = vmatpush1.msra.mxu0 0.0
    %291 = vmatprep.subr.mxu0 0.0
    %292 = vmatpush1.msra.mxu0 0.0
    %293 = vmatprep.subr.mxu0 0.0
    %294 = vmatpush1.msra.mxu0 0.0
    %295 = vmatprep.subr.mxu0 0.0
    %296 = vmatpush1.msra.mxu0 0.0
    %297 = vmatprep.subr.mxu0 0.0
    %298 = vmatpush1.msra.mxu0 0.0
    %299 = vmatprep.subr.mxu0 0.0
    %300 = vmatpush1.msra.mxu0 0.0
    %301 = vmatprep.subr.mxu0 0.0
    %302 = vmatpush1.msra.mxu0 0.0
    %303 = vmatprep.subr.mxu0 0.0
    %304 = vmatpush1.msra.mxu0 0.0
    %305 = vmatprep.subr.mxu0 0.0
    %306 = vmatpush1.msra.mxu0 0.0
    %307 = vmatprep.subr.mxu0 0.0
    %308 = vmatpush1.msra.mxu0 0.0
    %309 = vmatprep.subr.mxu0 0.0
    %310 = vmatpush1.msra.mxu0 0.0
    %311 = vmatprep.subr.mxu0 0.0
    %312 = vmatpush1.msra.mxu0 0.0
    %313 = vmatprep.subr.mxu0 0.0
    %314 = vmatpush1.msra.mxu0 0.0
    %315 = vmatprep.subr.mxu0 0.0
    %316 = vmatpush1.msra.mxu0 0.0
    %317 = vmatprep.subr.mxu0 0.0
    %318 = vmatpush1.msra.mxu0 0.0
    %319 = vmatprep.subr.mxu0 0.0
    %320 = vmatpush1.msra.mxu0 0.0
    %321 = vmatprep.subr.mxu0 0.0
    %322 = vmatpush1.msra.mxu0 0.0
    %323 = vmatprep.subr.mxu0 0.0
    %324 = vmatpush1.msra.mxu0 0.0
    %325 = vmatprep.subr.mxu0 0.0
    %326 = vmatpush1.msra.mxu0 0.0
    %327 = vmatprep.subr.mxu0 0.0
    %328 = vmatpush1.msra.mxu0 0.0
    %329 = vmatprep.subr.mxu0 0.0
    %330 = vmatpush1.msra.mxu0 0.0
    %331 = vmatprep.subr.mxu0 0.0
    %332 = vmatpush1.msra.mxu0 0.0
    %333 = vmatprep.subr.mxu0 0.0
    %334 = vmatpush1.msra.mxu0 0.0
    %335 = vmatprep.mubr.f32.mxu0 0.0
    %336 = vmatmul.mubr.f32.gmra.mrb[0].mxu0 %v269
    %v337 = vpop.f32.mrb[0].mxu0
    %v338 = vadd.f32 0.0, %v337
    %v339 = vpop.f32.mrb[0].mxu0
    %340 = vdwg.mxu0
    %v341 = vadd.f32 %v253, %v338
    %v342 = vmul.f32 %v341, %v266
    %v343 = vtanh.pop %v342
    %v344 = vmul.f32 %v343, %v266
    %v345 = vadd.f32 %v344, %v267
    %v346 = vmul.f32 %v345, 0.0
    %348 = vrot.lane.b32.xlu0 %v345, 64
    %v349 = vpop.permute.xlu0 %348
    %v351 = vmul.f32 %v345, %v349
    %353 = vrot.lane.b32.xlu0 %v351, 32
    %v354 = vpop.permute.xlu0 %353
    %v356 = vadd.f32 %v346, %v354
    %v357 = vtanh.pop %v356
    %359 = vrot.lane.b32.xlu0 %v357, 64
    %v360 = vpop.permute.xlu0 %359
    %v362 = vmul.f32 %v345, %v360
    %364 = vrot.lane.b32.xlu0 %v362, 32
    %v365 = vpop.permute.xlu0 %364
    %v367 = vsel %vm179, %v365, 0.0
    %v368 = vlaneseq
    %v369 = vshrl.u32 %v368, 7
    %v370 = vsub.s32 0, %v369
    %v371 = vrot.slane %v58, %v370
    %vm372 = vcmask 523264
    %v374 = vsel %vm372, %v367, 0
    %376 = vmatprep.subr.mxu0 0.0
    %377 = vmatpush1.msra.mxu0 %v50
    %378 = vmatprep.subr.mxu0 0.0
    %379 = vmatpush1.msra.mxu0 %v51
    %380 = vmatprep.subr.mxu0 0.0
    %381 = vmatpush1.msra.mxu0 %v52
    %382 = vmatprep.subr.mxu0 0.0
    %383 = vmatpush1.msra.mxu0 %v53
    %384 = vmatprep.subr.mxu0 0.0
    %385 = vmatpush1.msra.mxu0 %v54
    %386 = vmatprep.subr.mxu0 0.0
    %387 = vmatpush1.msra.mxu0 %v55
    %388 = vmatprep.subr.mxu0 0.0
    %389 = vmatpush1.msra.mxu0 %v56
    %390 = vmatprep.subr.mxu0 0.0
    %391 = vmatpush1.msra.mxu0 %v57
    %392 = vmatprep.subr.mxu0 0.0
    %393 = vmatpush1.msra.mxu0 0.0
    %394 = vmatprep.subr.mxu0 0.0
    %395 = vmatpush1.msra.mxu0 0.0
    %396 = vmatprep.subr.mxu0 0.0
    %397 = vmatpush1.msra.mxu0 0.0
    %398 = vmatprep.subr.mxu0 0.0
    %399 = vmatpush1.msra.mxu0 0.0
    %400 = vmatprep.subr.mxu0 0.0
    %401 = vmatpush1.msra.mxu0 0.0
    %402 = vmatprep.subr.mxu0 0.0
    %403 = vmatpush1.msra.mxu0 0.0
    %404 = vmatprep.subr.mxu0 0.0
    %405 = vmatpush1.msra.mxu0 0.0
    %406 = vmatprep.subr.mxu0 0.0
    %407 = vmatpush1.msra.mxu0 0.0
    %408 = vmatprep.subr.mxu0 0.0
    %409 = vmatpush1.msra.mxu0 0.0
    %410 = vmatprep.subr.mxu0 0.0
    %411 = vmatpush1.msra.mxu0 0.0
    %412 = vmatprep.subr.mxu0 0.0
    %413 = vmatpush1.msra.mxu0 0.0
    %414 = vmatprep.subr.mxu0 0.0
    %415 = vmatpush1.msra.mxu0 0.0
    %416 = vmatprep.subr.mxu0 0.0
    %417 = vmatpush1.msra.mxu0 0.0
    %418 = vmatprep.subr.mxu0 0.0
    %419 = vmatpush1.msra.mxu0 0.0
    %420 = vmatprep.subr.mxu0 0.0
    %421 = vmatpush1.msra.mxu0 0.0
    %422 = vmatprep.subr.mxu0 0.0
    %423 = vmatpush1.msra.mxu0 0.0
    %424 = vmatprep.subr.mxu0 0.0
    %425 = vmatpush1.msra.mxu0 0.0
    %426 = vmatprep.subr.mxu0 0.0
    %427 = vmatpush1.msra.mxu0 0.0
    %428 = vmatprep.subr.mxu0 0.0
    %429 = vmatpush1.msra.mxu0 0.0
    %430 = vmatprep.subr.mxu0 0.0
    %431 = vmatpush1.msra.mxu0 0.0
    %432 = vmatprep.subr.mxu0 0.0
    %433 = vmatpush1.msra.mxu0 0.0
    %434 = vmatprep.subr.mxu0 0.0
    %435 = vmatpush1.msra.mxu0 0.0
    %436 = vmatprep.subr.mxu0 0.0
    %437 = vmatpush1.msra.mxu0 0.0
    %438 = vmatprep.subr.mxu0 0.0
    %439 = vmatpush1.msra.mxu0 0.0
    %440 = vmatprep.mubr.f32.mxu0 0.0
    %441 = vmatmul.mubr.f32.gmra.mrb[0].mxu0 %v374
    %v442 = vpop.f32.mrb[0].mxu0
    %v443 = vadd.f32 %v371, %v442
    %v444 = vpop.f32.mrb[0].mxu0
    %445 = vdwg.mxu0
    %v446 = vmul.f32 %v443, %v266
    %v447 = vtanh.pop %v446
    %v448 = vmul.f32 %v447, %v266
    %v449 = vadd.f32 %v448, %v267
    %v450 = vmul.f32 %v449, 0.0
    %452 = vrot.lane.b32.xlu0 %v449, 64
    %v453 = vpop.permute.xlu0 %452
    %v455 = vmul.f32 %v449, %v453
    %457 = vrot.lane.b32.xlu0 %v455, 32
    %v458 = vpop.permute.xlu0 %457
    %v460 = vadd.f32 %v450, %v458
    %v461 = vtanh.pop %v460
    %463 = vrot.lane.b32.xlu0 %v461, 64
    %v464 = vpop.permute.xlu0 %463
    %v466 = vmul.f32 %v449, %v464
    %v467 = vsel %vm179, %v365, 0
    %469 = vmatprep.subr.mxu0 0.0
    %470 = vmatpush1.msra.mxu0 %v45
    %471 = vmatprep.subr.mxu0 0.0
    %472 = vmatpush1.msra.mxu0 %v46
    %473 = vmatprep.subr.mxu0 0.0
    %474 = vmatpush1.msra.mxu0 %v47
    %475 = vmatprep.subr.mxu0 0.0
    %476 = vmatpush1.msra.mxu0 %v48
    %477 = vmatprep.subr.mxu0 0.0
    %478 = vmatpush1.msra.mxu0 0.0
    %479 = vmatprep.subr.mxu0 0.0
    %480 = vmatpush1.msra.mxu0 0.0
    %481 = vmatprep.subr.mxu0 0.0
    %482 = vmatpush1.msra.mxu0 0.0
    %483 = vmatprep.subr.mxu0 0.0
    %484 = vmatpush1.msra.mxu0 0.0
    %485 = vmatprep.subr.mxu0 0.0
    %486 = vmatpush1.msra.mxu0 0.0
    %487 = vmatprep.subr.mxu0 0.0
    %488 = vmatpush1.msra.mxu0 0.0
    %489 = vmatprep.subr.mxu0 0.0
    %490 = vmatpush1.msra.mxu0 0.0
    %491 = vmatprep.subr.mxu0 0.0
    %492 = vmatpush1.msra.mxu0 0.0
    %493 = vmatprep.subr.mxu0 0.0
    %494 = vmatpush1.msra.mxu0 0.0
    %495 = vmatprep.subr.mxu0 0.0
    %496 = vmatpush1.msra.mxu0 0.0
    %497 = vmatprep.subr.mxu0 0.0
    %498 = vmatpush1.msra.mxu0 0.0
    %499 = vmatprep.subr.mxu0 0.0
    %500 = vmatpush1.msra.mxu0 0.0
    %501 = vmatprep.subr.mxu0 0.0
    %502 = vmatpush1.msra.mxu0 0.0
    %503 = vmatprep.subr.mxu0 0.0
    %504 = vmatpush1.msra.mxu0 0.0
    %505 = vmatprep.subr.mxu0 0.0
    %506 = vmatpush1.msra.mxu0 0.0
    %507 = vmatprep.subr.mxu0 0.0
    %508 = vmatpush1.msra.mxu0 0.0
    %509 = vmatprep.subr.mxu0 0.0
    %510 = vmatpush1.msra.mxu0 0.0
    %511 = vmatprep.subr.mxu0 0.0
    %512 = vmatpush1.msra.mxu0 0.0
    %513 = vmatprep.subr.mxu0 0.0
    %514 = vmatpush1.msra.mxu0 0.0
    %515 = vmatprep.subr.mxu0 0.0
    %516 = vmatpush1.msra.mxu0 0.0
    %517 = vmatprep.subr.mxu0 0.0
    %518 = vmatpush1.msra.mxu0 0.0
    %519 = vmatprep.subr.mxu0 0.0
    %520 = vmatpush1.msra.mxu0 0.0
    %521 = vmatprep.subr.mxu0 0.0
    %522 = vmatpush1.msra.mxu0 0.0
    %523 = vmatprep.subr.mxu0 0.0
    %524 = vmatpush1.msra.mxu0 0.0
    %525 = vmatprep.subr.mxu0 0.0
    %526 = vmatpush1.msra.mxu0 0.0
    %527 = vmatprep.subr.mxu0 0.0
    %528 = vmatpush1.msra.mxu0 0.0
    %529 = vmatprep.subr.mxu0 0.0
    %530 = vmatpush1.msra.mxu0 0.0
    %531 = vmatprep.subr.mxu0 0.0
    %532 = vmatpush1.msra.mxu0 0.0
    %533 = vmatprep.mubr.f32.mxu0 0.0
    %534 = vmatmul.mubr.f32.gmra.mrb[0].mxu0 %v467
    %v535 = vpop.f32.mrb[0].mxu0
    %v536 = vadd.f32 0.0, %v535
    %v537 = vpop.f32.mrb[0].mxu0
    %538 = vdwg.mxu0
    %v540 = vrot.slane %v536, 6
    %v542 = vadd.f32 %v253, %v540
    %v543 = vmul.f32 %v542, %v266
    %v544 = vtanh.pop %v543
    %v545 = vmul.f32 %v544, %v266
    %v546 = vadd.f32 %v545, %v267
    %v548 = vrot.slane %v356, 6
    %v550 = vmul.f32 %v546, %v548
    %552 = vrot.lane.b32.xlu0 %v546, 64
    %v553 = vpop.permute.xlu0 %552
    %v555 = vmul.f32 %v546, %v553
    %557 = vrot.lane.b32.xlu0 %v555, 32
    %v558 = vpop.permute.xlu0 %557
    %v560 = vadd.f32 %v550, %v558
    %v561 = vtanh.pop %v560
    %563 = vrot.lane.b32.xlu0 %v561, 64
    %v564 = vpop.permute.xlu0 %563
    %v566 = vmul.f32 %v546, %v564
    %568 = vrot.lane.b32.xlu0 %v566, 32
    %v569 = vpop.permute.xlu0 %568
    %v572 = vrot.slane %v466, 6
    %573 = vrot.lane.b32.xlu0 %v572, 64
    %v574 = vpop.permute.xlu0 %573
    %v576 = vsel %vm179, %v569, %v574
    %v578 = vrot.slane %v576, 2
    %v579 = vsel %vm372, %v578, 0
    %581 = vmatprep.subr.mxu0 0.0
    %582 = vmatpush1.msra.mxu0 %v50
    %583 = vmatprep.subr.mxu0 0.0
    %584 = vmatpush1.msra.mxu0 %v51
    %585 = vmatprep.subr.mxu0 0.0
    %586 = vmatpush1.msra.mxu0 %v52
    %587 = vmatprep.subr.mxu0 0.0
    %588 = vmatpush1.msra.mxu0 %v53
    %589 = vmatprep.subr.mxu0 0.0
    %590 = vmatpush1.msra.mxu0 %v54
    %591 = vmatprep.subr.mxu0 0.0
    %592 = vmatpush1.msra.mxu0 %v55
    %593 = vmatprep.subr.mxu0 0.0
    %594 = vmatpush1.msra.mxu0 %v56
    %595 = vmatprep.subr.mxu0 0.0
    %596 = vmatpush1.msra.mxu0 %v57
    %597 = vmatprep.subr.mxu0 0.0
    %598 = vmatpush1.msra.mxu0 0.0
    %599 = vmatprep.subr.mxu0 0.0
    %600 = vmatpush1.msra.mxu0 0.0
    %601 = vmatprep.subr.mxu0 0.0
    %602 = vmatpush1.msra.mxu0 0.0
    %603 = vmatprep.subr.mxu0 0.0
    %604 = vmatpush1.msra.mxu0 0.0
    %605 = vmatprep.subr.mxu0 0.0
    %606 = vmatpush1.msra.mxu0 0.0
    %607 = vmatprep.subr.mxu0 0.0
    %608 = vmatpush1.msra.mxu0 0.0
    %609 = vmatprep.subr.mxu0 0.0
    %610 = vmatpush1.msra.mxu0 0.0
    %611 = vmatprep.subr.mxu0 0.0
    %612 = vmatpush1.msra.mxu0 0.0
    %613 = vmatprep.subr.mxu0 0.0
    %614 = vmatpush1.msra.mxu0 0.0
    %615 = vmatprep.subr.mxu0 0.0
    %616 = vmatpush1.msra.mxu0 0.0
    %617 = vmatprep.subr.mxu0 0.0
    %618 = vmatpush1.msra.mxu0 0.0
    %619 = vmatprep.subr.mxu0 0.0
    %620 = vmatpush1.msra.mxu0 0.0
    %621 = vmatprep.subr.mxu0 0.0
    %622 = vmatpush1.msra.mxu0 0.0
    %623 = vmatprep.subr.mxu0 0.0
    %624 = vmatpush1.msra.mxu0 0.0
    %625 = vmatprep.subr.mxu0 0.0
    %626 = vmatpush1.msra.mxu0 0.0
    %627 = vmatprep.subr.mxu0 0.0
    %628 = vmatpush1.msra.mxu0 0.0
    %629 = vmatprep.subr.mxu0 0.0
    %630 = vmatpush1.msra.mxu0 0.0
    %631 = vmatprep.subr.mxu0 0.0
    %632 = vmatpush1.msra.mxu0 0.0
    %633 = vmatprep.subr.mxu0 0.0
    %634 = vmatpush1.msra.mxu0 0.0
    %635 = vmatprep.subr.mxu0 0.0
    %636 = vmatpush1.msra.mxu0 0.0
    %637 = vmatprep.subr.mxu0 0.0
    %638 = vmatpush1.msra.mxu0 0.0
    %639 = vmatprep.subr.mxu0 0.0
    %640 = vmatpush1.msra.mxu0 0.0
    %641 = vmatprep.subr.mxu0 0.0
    %642 = vmatpush1.msra.mxu0 0.0
    %643 = vmatprep.subr.mxu0 0.0
    %644 = vmatpush1.msra.mxu0 0.0
    %645 = vmatprep.mubr.f32.mxu0 0.0
    %646 = vmatmul.mubr.f32.gmra.mrb[0].mxu0 %v579
    %v647 = vpop.f32.mrb[0].mxu0
    %v648 = vadd.f32 %v371, %v647
    %v649 = vpop.f32.mrb[0].mxu0
    %650 = vdwg.mxu0
    %v651 = vmul.f32 %v648, %v266
    %v652 = vtanh.pop %v651
    %v653 = vmul.f32 %v652, %v266
    %v654 = vadd.f32 %v653, %v267
    %v655 = vmul.f32 %v654, %v460
    %657 = vrot.lane.b32.xlu0 %v654, 64
    %v658 = vpop.permute.xlu0 %657
    %v660 = vmul.f32 %v654, %v658
    %662 = vrot.lane.b32.xlu0 %v660, 32
    %v663 = vpop.permute.xlu0 %662
    %v665 = vadd.f32 %v655, %v663
    %v666 = vtanh.pop %v665
    %668 = vrot.lane.b32.xlu0 %v666, 64
    %v669 = vpop.permute.xlu0 %668
    %v671 = vmul.f32 %v654, %v669
    %v672 = vrot.slane %v566, 2
    %673 = vrot.lane.b32.xlu0 %v672, 32
    %v674 = vpop.permute.xlu0 %673
    %v675 = vsel %vm179, %v674, 0
    %677 = vmatprep.subr.mxu0 0.0
    %678 = vmatpush1.msra.mxu0 %v45
    %679 = vmatprep.subr.mxu0 0.0
    %680 = vmatpush1.msra.mxu0 %v46
    %681 = vmatprep.subr.mxu0 0.0
    %682 = vmatpush1.msra.mxu0 %v47
    %683 = vmatprep.subr.mxu0 0.0
    %684 = vmatpush1.msra.mxu0 %v48
    %685 = vmatprep.subr.mxu0 0.0
    %686 = vmatpush1.msra.mxu0 0.0
    %687 = vmatprep.subr.mxu0 0.0
    %688 = vmatpush1.msra.mxu0 0.0
    %689 = vmatprep.subr.mxu0 0.0
    %690 = vmatpush1.msra.mxu0 0.0
    %691 = vmatprep.subr.mxu0 0.0
    %692 = vmatpush1.msra.mxu0 0.0
    %693 = vmatprep.subr.mxu0 0.0
    %694 = vmatpush1.msra.mxu0 0.0
    %695 = vmatprep.subr.mxu0 0.0
    %696 = vmatpush1.msra.mxu0 0.0
    %697 = vmatprep.subr.mxu0 0.0
    %698 = vmatpush1.msra.mxu0 0.0
    %699 = vmatprep.subr.mxu0 0.0
    %700 = vmatpush1.msra.mxu0 0.0
    %701 = vmatprep.subr.mxu0 0.0
    %702 = vmatpush1.msra.mxu0 0.0
    %703 = vmatprep.subr.mxu0 0.0
    %704 = vmatpush1.msra.mxu0 0.0
    %705 = vmatprep.subr.mxu0 0.0
    %706 = vmatpush1.msra.mxu0 0.0
    %707 = vmatprep.subr.mxu0 0.0
    %708 = vmatpush1.msra.mxu0 0.0
    %709 = vmatprep.subr.mxu0 0.0
    %710 = vmatpush1.msra.mxu0 0.0
    %711 = vmatprep.subr.mxu0 0.0
    %712 = vmatpush1.msra.mxu0 0.0
    %713 = vmatprep.subr.mxu0 0.0
    %714 = vmatpush1.msra.mxu0 0.0
    %715 = vmatprep.subr.mxu0 0.0
    %716 = vmatpush1.msra.mxu0 0.0
    %717 = vmatprep.subr.mxu0 0.0
    %718 = vmatpush1.msra.mxu0 0.0
    %719 = vmatprep.subr.mxu0 0.0
    %720 = vmatpush1.msra.mxu0 0.0
    %721 = vmatprep.subr.mxu0 0.0
    %722 = vmatpush1.msra.mxu0 0.0
    %723 = vmatprep.subr.mxu0 0.0
    %724 = vmatpush1.msra.mxu0 0.0
    %725 = vmatprep.subr.mxu0 0.0
    %726 = vmatpush1.msra.mxu0 0.0
    %727 = vmatprep.subr.mxu0 0.0
    %728 = vmatpush1.msra.mxu0 0.0
    %729 = vmatprep.subr.mxu0 0.0
    %730 = vmatpush1.msra.mxu0 0.0
    %731 = vmatprep.subr.mxu0 0.0
    %732 = vmatpush1.msra.mxu0 0.0
    %733 = vmatprep.subr.mxu0 0.0
    %734 = vmatpush1.msra.mxu0 0.0
    %735 = vmatprep.subr.mxu0 0.0
    %736 = vmatpush1.msra.mxu0 0.0
    %737 = vmatprep.subr.mxu0 0.0
    %738 = vmatpush1.msra.mxu0 0.0
    %739 = vmatprep.subr.mxu0 0.0
    %740 = vmatpush1.msra.mxu0 0.0
    %741 = vmatprep.mubr.f32.mxu0 0.0
    %742 = vmatmul.mubr.f32.gmra.mrb[0].mxu0 %v675
    %v743 = vpop.f32.mrb[0].mxu0
    %v744 = vadd.f32 0.0, %v743
    %v745 = vpop.f32.mrb[0].mxu0
    %746 = vdwg.mxu0
    %v748 = vrot.slane %v744, 4
    %v750 = vadd.f32 %v253, %v748
    %v751 = vmul.f32 %v750, %v266
    %v752 = vtanh.pop %v751
    %v753 = vmul.f32 %v752, %v266
    %v754 = vadd.f32 %v753, %v267
    %v756 = vrot.slane %v560, 6
    %v758 = vmul.f32 %v754, %v756
    %760 = vrot.lane.b32.xlu0 %v754, 64
    %v761 = vpop.permute.xlu0 %760
    %v763 = vmul.f32 %v754, %v761
    %765 = vrot.lane.b32.xlu0 %v763, 32
    %v766 = vpop.permute.xlu0 %765
    %v768 = vadd.f32 %v758, %v766
    %v769 = vtanh.pop %v768
    %771 = vrot.lane.b32.xlu0 %v769, 64
    %v772 = vpop.permute.xlu0 %771
    %v774 = vmul.f32 %v754, %v772
    %776 = vrot.lane.b32.xlu0 %v774, 32
    %v777 = vpop.permute.xlu0 %776
    %v780 = vrot.slane %v671, 4
    %781 = vrot.lane.b32.xlu0 %v780, 64
    %v782 = vpop.permute.xlu0 %781
    %v784 = vsel %vm179, %v777, %v782
    %v786 = vrot.slane %v784, 4
    %v787 = vsel %vm372, %v786, 0
    %789 = vmatprep.subr.mxu0 0.0
    %790 = vmatpush1.msra.mxu0 %v50
    %791 = vmatprep.subr.mxu0 0.0
    %792 = vmatpush1.msra.mxu0 %v51
    %793 = vmatprep.subr.mxu0 0.0
    %794 = vmatpush1.msra.mxu0 %v52
    %795 = vmatprep.subr.mxu0 0.0
    %796 = vmatpush1.msra.mxu0 %v53
    %797 = vmatprep.subr.mxu0 0.0
    %798 = vmatpush1.msra.mxu0 %v54
    %799 = vmatprep.subr.mxu0 0.0
    %800 = vmatpush1.msra.mxu0 %v55
    %801 = vmatprep.subr.mxu0 0.0
    %802 = vmatpush1.msra.mxu0 %v56
    %803 = vmatprep.subr.mxu0 0.0
    %804 = vmatpush1.msra.mxu0 %v57
    %805 = vmatprep.subr.mxu0 0.0
    %806 = vmatpush1.msra.mxu0 0.0
    %807 = vmatprep.subr.mxu0 0.0
    %808 = vmatpush1.msra.mxu0 0.0
    %809 = vmatprep.subr.mxu0 0.0
    %810 = vmatpush1.msra.mxu0 0.0
    %811 = vmatprep.subr.mxu0 0.0
    %812 = vmatpush1.msra.mxu0 0.0
    %813 = vmatprep.subr.mxu0 0.0
    %814 = vmatpush1.msra.mxu0 0.0
    %815 = vmatprep.subr.mxu0 0.0
    %816 = vmatpush1.msra.mxu0 0.0
    %817 = vmatprep.subr.mxu0 0.0
    %818 = vmatpush1.msra.mxu0 0.0
    %819 = vmatprep.subr.mxu0 0.0
    %820 = vmatpush1.msra.mxu0 0.0
    %821 = vmatprep.subr.mxu0 0.0
    %822 = vmatpush1.msra.mxu0 0.0
    %823 = vmatprep.subr.mxu0 0.0
    %824 = vmatpush1.msra.mxu0 0.0
    %825 = vmatprep.subr.mxu0 0.0
    %826 = vmatpush1.msra.mxu0 0.0
    %827 = vmatprep.subr.mxu0 0.0
    %828 = vmatpush1.msra.mxu0 0.0
    %829 = vmatprep.subr.mxu0 0.0
    %830 = vmatpush1.msra.mxu0 0.0
    %831 = vmatprep.subr.mxu0 0.0
    %832 = vmatpush1.msra.mxu0 0.0
    %833 = vmatprep.subr.mxu0 0.0
    %834 = vmatpush1.msra.mxu0 0.0
    %835 = vmatprep.subr.mxu0 0.0
    %836 = vmatpush1.msra.mxu0 0.0
    %837 = vmatprep.subr.mxu0 0.0
    %838 = vmatpush1.msra.mxu0 0.0
    %839 = vmatprep.subr.mxu0 0.0
    %840 = vmatpush1.msra.mxu0 0.0
    %841 = vmatprep.subr.mxu0 0.0
    %842 = vmatpush1.msra.mxu0 0.0
    %843 = vmatprep.subr.mxu0 0.0
    %844 = vmatpush1.msra.mxu0 0.0
    %845 = vmatprep.subr.mxu0 0.0
    %846 = vmatpush1.msra.mxu0 0.0
    %847 = vmatprep.subr.mxu0 0.0
    %848 = vmatpush1.msra.mxu0 0.0
    %849 = vmatprep.subr.mxu0 0.0
    %850 = vmatpush1.msra.mxu0 0.0
    %851 = vmatprep.subr.mxu0 0.0
    %852 = vmatpush1.msra.mxu0 0.0
    %853 = vmatprep.mubr.f32.mxu0 0.0
    %854 = vmatmul.mubr.f32.gmra.mrb[0].mxu0 %v787
    %v855 = vpop.f32.mrb[0].mxu0
    %v856 = vadd.f32 %v371, %v855
    %v857 = vpop.f32.mrb[0].mxu0
    %858 = vdwg.mxu0
    %v859 = vmul.f32 %v856, %v266
    %v860 = vtanh.pop %v859
    %v861 = vmul.f32 %v860, %v266
    %v862 = vadd.f32 %v861, %v267
    %v863 = vmul.f32 %v862, %v665
    %865 = vrot.lane.b32.xlu0 %v862, 64
    %v866 = vpop.permute.xlu0 %865
    %v868 = vmul.f32 %v862, %v866
    %870 = vrot.lane.b32.xlu0 %v868, 32
    %v871 = vpop.permute.xlu0 %870
    %v873 = vadd.f32 %v863, %v871
    %v874 = vtanh.pop %v873
    %876 = vrot.lane.b32.xlu0 %v874, 64
    %v877 = vpop.permute.xlu0 %876
    %v879 = vmul.f32 %v862, %v877
    %v880 = vrot.slane %v774, 4
    %881 = vrot.lane.b32.xlu0 %v880, 32
    %v882 = vpop.permute.xlu0 %881
    %v883 = vsel %vm179, %v882, 0
    %885 = vmatprep.subr.mxu0 0.0
    %886 = vmatpush1.msra.mxu0 %v45
    %887 = vmatprep.subr.mxu0 0.0
    %888 = vmatpush1.msra.mxu0 %v46
    %889 = vmatprep.subr.mxu0 0.0
    %890 = vmatpush1.msra.mxu0 %v47
    %891 = vmatprep.subr.mxu0 0.0
    %892 = vmatpush1.msra.mxu0 %v48
    %893 = vmatprep.subr.mxu0 0.0
    %894 = vmatpush1.msra.mxu0 0.0
    %895 = vmatprep.subr.mxu0 0.0
    %896 = vmatpush1.msra.mxu0 0.0
    %897 = vmatprep.subr.mxu0 0.0
    %898 = vmatpush1.msra.mxu0 0.0
    %899 = vmatprep.subr.mxu0 0.0
    %900 = vmatpush1.msra.mxu0 0.0
    %901 = vmatprep.subr.mxu0 0.0
    %902 = vmatpush1.msra.mxu0 0.0
    %903 = vmatprep.subr.mxu0 0.0
    %904 = vmatpush1.msra.mxu0 0.0
    %905 = vmatprep.subr.mxu0 0.0
    %906 = vmatpush1.msra.mxu0 0.0
    %907 = vmatprep.subr.mxu0 0.0
    %908 = vmatpush1.msra.mxu0 0.0
    %909 = vmatprep.subr.mxu0 0.0
    %910 = vmatpush1.msra.mxu0 0.0
    %911 = vmatprep.subr.mxu0 0.0
    %912 = vmatpush1.msra.mxu0 0.0
    %913 = vmatprep.subr.mxu0 0.0
    %914 = vmatpush1.msra.mxu0 0.0
    %915 = vmatprep.subr.mxu0 0.0
    %916 = vmatpush1.msra.mxu0 0.0
    %917 = vmatprep.subr.mxu0 0.0
    %918 = vmatpush1.msra.mxu0 0.0
    %919 = vmatprep.subr.mxu0 0.0
    %920 = vmatpush1.msra.mxu0 0.0
    %921 = vmatprep.subr.mxu0 0.0
    %922 = vmatpush1.msra.mxu0 0.0
    %923 = vmatprep.subr.mxu0 0.0
    %924 = vmatpush1.msra.mxu0 0.0
    %925 = vmatprep.subr.mxu0 0.0
    %926 = vmatpush1.msra.mxu0 0.0
    %927 = vmatprep.subr.mxu0 0.0
    %928 = vmatpush1.msra.mxu0 0.0
    %929 = vmatprep.subr.mxu0 0.0
    %930 = vmatpush1.msra.mxu0 0.0
    %931 = vmatprep.subr.mxu0 0.0
    %932 = vmatpush1.msra.mxu0 0.0
    %933 = vmatprep.subr.mxu0 0.0
    %934 = vmatpush1.msra.mxu0 0.0
    %935 = vmatprep.subr.mxu0 0.0
    %936 = vmatpush1.msra.mxu0 0.0
    %937 = vmatprep.subr.mxu0 0.0
    %938 = vmatpush1.msra.mxu0 0.0
    %939 = vmatprep.subr.mxu0 0.0
    %940 = vmatpush1.msra.mxu0 0.0
    %941 = vmatprep.subr.mxu0 0.0
    %942 = vmatpush1.msra.mxu0 0.0
    %943 = vmatprep.subr.mxu0 0.0
    %944 = vmatpush1.msra.mxu0 0.0
    %945 = vmatprep.subr.mxu0 0.0
    %946 = vmatpush1.msra.mxu0 0.0
    %947 = vmatprep.subr.mxu0 0.0
    %948 = vmatpush1.msra.mxu0 0.0
    %949 = vmatprep.mubr.f32.mxu0 0.0
    %950 = vmatmul.mubr.f32.gmra.mrb[0].mxu0 %v883
    %v951 = vpop.f32.mrb[0].mxu0
    %v952 = vadd.f32 0.0, %v951
    %v953 = vpop.f32.mrb[0].mxu0
    %954 = vdwg.mxu0
    %v956 = vrot.slane %v952, 2
    %v958 = vadd.f32 %v253, %v956
    %v959 = vmul.f32 %v958, %v266
    %v960 = vtanh.pop %v959
    %v961 = vmul.f32 %v960, %v266
    %v962 = vadd.f32 %v961, %v267
    %v964 = vrot.slane %v768, 6
    %v966 = vmul.f32 %v962, %v964
    %968 = vrot.lane.b32.xlu0 %v962, 64
    %v969 = vpop.permute.xlu0 %968
    %v971 = vmul.f32 %v962, %v969
    %973 = vrot.lane.b32.xlu0 %v971, 32
    %v974 = vpop.permute.xlu0 %973
    %v976 = vadd.f32 %v966, %v974
    %v977 = vtanh.pop %v976
    %979 = vrot.lane.b32.xlu0 %v977, 64
    %v980 = vpop.permute.xlu0 %979
    %v982 = vmul.f32 %v962, %v980
    %984 = vrot.lane.b32.xlu0 %v982, 32
    %v985 = vpop.permute.xlu0 %984
    %v988 = vrot.slane %v879, 2
    %989 = vrot.lane.b32.xlu0 %v988, 64
    %v990 = vpop.permute.xlu0 %989
    %v992 = vsel %vm179, %v985, %v990
    %v994 = vrot.slane %v992, 6
    %v995 = vsel %vm372, %v994, 0
    %997 = vmatprep.subr.mxu0 0.0
    %998 = vmatpush1.msra.mxu0 %v50
    %999 = vmatprep.subr.mxu0 0.0
    %1000 = vmatpush1.msra.mxu0 %v51
    %1001 = vmatprep.subr.mxu0 0.0
    %1002 = vmatpush1.msra.mxu0 %v52
    %1003 = vmatprep.subr.mxu0 0.0
    %1004 = vmatpush1.msra.mxu0 %v53
    %1005 = vmatprep.subr.mxu0 0.0
    %1006 = vmatpush1.msra.mxu0 %v54
    %1007 = vmatprep.subr.mxu0 0.0
    %1008 = vmatpush1.msra.mxu0 %v55
    %1009 = vmatprep.subr.mxu0 0.0
    %1010 = vmatpush1.msra.mxu0 %v56
    %1011 = vmatprep.subr.mxu0 0.0
    %1012 = vmatpush1.msra.mxu0 %v57
    %1013 = vmatprep.subr.mxu0 0.0
    %1014 = vmatpush1.msra.mxu0 0.0
    %1015 = vmatprep.subr.mxu0 0.0
    %1016 = vmatpush1.msra.mxu0 0.0
    %1017 = vmatprep.subr.mxu0 0.0
    %1018 = vmatpush1.msra.mxu0 0.0
    %1019 = vmatprep.subr.mxu0 0.0
    %1020 = vmatpush1.msra.mxu0 0.0
    %1021 = vmatprep.subr.mxu0 0.0
    %1022 = vmatpush1.msra.mxu0 0.0
    %1023 = vmatprep.subr.mxu0 0.0
    %1024 = vmatpush1.msra.mxu0 0.0
    %1025 = vmatprep.subr.mxu0 0.0
    %1026 = vmatpush1.msra.mxu0 0.0
    %1027 = vmatprep.subr.mxu0 0.0
    %1028 = vmatpush1.msra.mxu0 0.0
    %1029 = vmatprep.subr.mxu0 0.0
    %1030 = vmatpush1.msra.mxu0 0.0
    %1031 = vmatprep.subr.mxu0 0.0
    %1032 = vmatpush1.msra.mxu0 0.0
    %1033 = vmatprep.subr.mxu0 0.0
    %1034 = vmatpush1.msra.mxu0 0.0
    %1035 = vmatprep.subr.mxu0 0.0
    %1036 = vmatpush1.msra.mxu0 0.0
    %1037 = vmatprep.subr.mxu0 0.0
    %1038 = vmatpush1.msra.mxu0 0.0
    %1039 = vmatprep.subr.mxu0 0.0
    %1040 = vmatpush1.msra.mxu0 0.0
    %1041 = vmatprep.subr.mxu0 0.0
    %1042 = vmatpush1.msra.mxu0 0.0
    %1043 = vmatprep.subr.mxu0 0.0
    %1044 = vmatpush1.msra.mxu0 0.0
    %1045 = vmatprep.subr.mxu0 0.0
    %1046 = vmatpush1.msra.mxu0 0.0
    %1047 = vmatprep.subr.mxu0 0.0
    %1048 = vmatpush1.msra.mxu0 0.0
    %1049 = vmatprep.subr.mxu0 0.0
    %1050 = vmatpush1.msra.mxu0 0.0
    %1051 = vmatprep.subr.mxu0 0.0
    %1052 = vmatpush1.msra.mxu0 0.0
    %1053 = vmatprep.subr.mxu0 0.0
    %1054 = vmatpush1.msra.mxu0 0.0
    %1055 = vmatprep.subr.mxu0 0.0
    %1056 = vmatpush1.msra.mxu0 0.0
    %1057 = vmatprep.subr.mxu0 0.0
    %1058 = vmatpush1.msra.mxu0 0.0
    %1059 = vmatprep.subr.mxu0 0.0
    %1060 = vmatpush1.msra.mxu0 0.0
    %1061 = vmatprep.mubr.f32.mxu0 0.0
    %1062 = vmatmul.mubr.f32.gmra.mrb[0].mxu0 %v995
    %v1063 = vpop.f32.mrb[0].mxu0
    %v1064 = vadd.f32 %v371, %v1063
    %v1065 = vpop.f32.mrb[0].mxu0
    %1066 = vdwg.mxu0
    %v1067 = vmul.f32 %v1064, %v266
    %v1068 = vtanh.pop %v1067
    %v1069 = vmul.f32 %v1068, %v266
    %v1070 = vadd.f32 %v1069, %v267
    %v1071 = vmul.f32 %v1070, %v873
    %1073 = vrot.lane.b32.xlu0 %v1070, 64
    %v1074 = vpop.permute.xlu0 %1073
    %v1076 = vmul.f32 %v1070, %v1074
    %1078 = vrot.lane.b32.xlu0 %v1076, 32
    %v1079 = vpop.permute.xlu0 %1078
    %v1081 = vadd.f32 %v1071, %v1079
    %v1082 = vtanh.pop %v1081
    %1084 = vrot.lane.b32.xlu0 %v1082, 64
    %v1085 = vpop.permute.xlu0 %1084
    %v1087 = vmul.f32 %v1070, %v1085
    %v1088 = vrot.slane %v982, 6
    %1089 = vrot.lane.b32.xlu0 %v1088, 32
    %v1090 = vpop.permute.xlu0 %1089
    %v1091 = vsel %vm179, %v1090, 0
    %1093 = vmatprep.subr.mxu0 0.0
    %1094 = vmatpush1.msra.mxu0 %v45
    %1095 = vmatprep.subr.mxu0 0.0
    %1096 = vmatpush1.msra.mxu0 %v46
    %1097 = vmatprep.subr.mxu0 0.0
    %1098 = vmatpush1.msra.mxu0 %v47
    %1099 = vmatprep.subr.mxu0 0.0
    %1100 = vmatpush1.msra.mxu0 %v48
    %1101 = vmatprep.subr.mxu0 0.0
    %1102 = vmatpush1.msra.mxu0 0.0
    %1103 = vmatprep.subr.mxu0 0.0
    %1104 = vmatpush1.msra.mxu0 0.0
    %1105 = vmatprep.subr.mxu0 0.0
    %1106 = vmatpush1.msra.mxu0 0.0
    %1107 = vmatprep.subr.mxu0 0.0
    %1108 = vmatpush1.msra.mxu0 0.0
    %1109 = vmatprep.subr.mxu0 0.0
    %1110 = vmatpush1.msra.mxu0 0.0
    %1111 = vmatprep.subr.mxu0 0.0
    %1112 = vmatpush1.msra.mxu0 0.0
    %1113 = vmatprep.subr.mxu0 0.0
    %1114 = vmatpush1.msra.mxu0 0.0
    %1115 = vmatprep.subr.mxu0 0.0
    %1116 = vmatpush1.msra.mxu0 0.0
    %1117 = vmatprep.subr.mxu0 0.0
    %1118 = vmatpush1.msra.mxu0 0.0
    %1119 = vmatprep.subr.mxu0 0.0
    %1120 = vmatpush1.msra.mxu0 0.0
    %1121 = vmatprep.subr.mxu0 0.0
    %1122 = vmatpush1.msra.mxu0 0.0
    %1123 = vmatprep.subr.mxu0 0.0
    %1124 = vmatpush1.msra.mxu0 0.0
    %1125 = vmatprep.subr.mxu0 0.0
    %1126 = vmatpush1.msra.mxu0 0.0
    %1127 = vmatprep.subr.mxu0 0.0
    %1128 = vmatpush1.msra.mxu0 0.0
    %1129 = vmatprep.subr.mxu0 0.0
    %1130 = vmatpush1.msra.mxu0 0.0
    %1131 = vmatprep.subr.mxu0 0.0
    %1132 = vmatpush1.msra.mxu0 0.0
    %1133 = vmatprep.subr.mxu0 0.0
    %1134 = vmatpush1.msra.mxu0 0.0
    %1135 = vmatprep.subr.mxu0 0.0
    %1136 = vmatpush1.msra.mxu0 0.0
    %1137 = vmatprep.subr.mxu0 0.0
    %1138 = vmatpush1.msra.mxu0 0.0
    %1139 = vmatprep.subr.mxu0 0.0
    %1140 = vmatpush1.msra.mxu0 0.0
    %1141 = vmatprep.subr.mxu0 0.0
    %1142 = vmatpush1.msra.mxu0 0.0
    %1143 = vmatprep.subr.mxu0 0.0
    %1144 = vmatpush1.msra.mxu0 0.0
    %1145 = vmatprep.subr.mxu0 0.0
    %1146 = vmatpush1.msra.mxu0 0.0
    %1147 = vmatprep.subr.mxu0 0.0
    %1148 = vmatpush1.msra.mxu0 0.0
    %1149 = vmatprep.subr.mxu0 0.0
    %1150 = vmatpush1.msra.mxu0 0.0
    %1151 = vmatprep.subr.mxu0 0.0
    %1152 = vmatpush1.msra.mxu0 0.0
    %1153 = vmatprep.subr.mxu0 0.0
    %1154 = vmatpush1.msra.mxu0 0.0
    %1155 = vmatprep.subr.mxu0 0.0
    %1156 = vmatpush1.msra.mxu0 0.0
    %1157 = vmatprep.mubr.f32.mxu0 0.0
    %1158 = vmatmul.mubr.f32.gmra.mrb[0].mxu0 %v1091
    %v1159 = vpop.f32.mrb[0].mxu0
    %v1160 = vadd.f32 0.0, %v1159
    %v1161 = vpop.f32.mrb[0].mxu0
    %1162 = vdwg.mxu0
    %v1163 = vadd.f32 %v258, %v1160
    %v1164 = vmul.f32 %v1163, %v266
    %v1165 = vtanh.pop %v1164
    %v1166 = vmul.f32 %v1165, %v266
    %v1167 = vadd.f32 %v1166, %v267
    %v1169 = vrot.slane %v976, 6
    %v1171 = vmul.f32 %v1167, %v1169
    %1173 = vrot.lane.b32.xlu0 %v1167, 64
    %v1174 = vpop.permute.xlu0 %1173
    %v1176 = vmul.f32 %v1167, %v1174
    %1178 = vrot.lane.b32.xlu0 %v1176, 32
    %v1179 = vpop.permute.xlu0 %1178
    %v1181 = vadd.f32 %v1171, %v1179
    %v1182 = vtanh.pop %v1181
    %1184 = vrot.lane.b32.xlu0 %v1182, 64
    %v1185 = vpop.permute.xlu0 %1184
    %v1187 = vmul.f32 %v1167, %v1185
    %1189 = vrot.lane.b32.xlu0 %v1187, 32
    %v1190 = vpop.permute.xlu0 %1189
    %1193 = vrot.lane.b32.xlu0 %v1087, 64
    %v1194 = vpop.permute.xlu0 %1193
    %v1196 = vsel %vm179, %v1190, %v1194
    %v1198 = vsel %vm372, %v1196, 0
    %1200 = vmatprep.subr.mxu0 0.0
    %1201 = vmatpush1.msra.mxu0 %v50
    %1202 = vmatprep.subr.mxu0 0.0
    %1203 = vmatpush1.msra.mxu0 %v51
    %1204 = vmatprep.subr.mxu0 0.0
    %1205 = vmatpush1.msra.mxu0 %v52
    %1206 = vmatprep.subr.mxu0 0.0
    %1207 = vmatpush1.msra.mxu0 %v53
    %1208 = vmatprep.subr.mxu0 0.0
    %1209 = vmatpush1.msra.mxu0 %v54
    %1210 = vmatprep.subr.mxu0 0.0
    %1211 = vmatpush1.msra.mxu0 %v55
    %1212 = vmatprep.subr.mxu0 0.0
    %1213 = vmatpush1.msra.mxu0 %v56
    %1214 = vmatprep.subr.mxu0 0.0
    %1215 = vmatpush1.msra.mxu0 %v57
    %1216 = vmatprep.subr.mxu0 0.0
    %1217 = vmatpush1.msra.mxu0 0.0
    %1218 = vmatprep.subr.mxu0 0.0
    %1219 = vmatpush1.msra.mxu0 0.0
    %1220 = vmatprep.subr.mxu0 0.0
    %1221 = vmatpush1.msra.mxu0 0.0
    %1222 = vmatprep.subr.mxu0 0.0
    %1223 = vmatpush1.msra.mxu0 0.0
    %1224 = vmatprep.subr.mxu0 0.0
    %1225 = vmatpush1.msra.mxu0 0.0
    %1226 = vmatprep.subr.mxu0 0.0
    %1227 = vmatpush1.msra.mxu0 0.0
    %1228 = vmatprep.subr.mxu0 0.0
    %1229 = vmatpush1.msra.mxu0 0.0
    %1230 = vmatprep.subr.mxu0 0.0
    %1231 = vmatpush1.msra.mxu0 0.0
    %1232 = vmatprep.subr.mxu0 0.0
    %1233 = vmatpush1.msra.mxu0 0.0
    %1234 = vmatprep.subr.mxu0 0.0
    %1235 = vmatpush1.msra.mxu0 0.0
    %1236 = vmatprep.subr.mxu0 0.0
    %1237 = vmatpush1.msra.mxu0 0.0
    %1238 = vmatprep.subr.mxu0 0.0
    %1239 = vmatpush1.msra.mxu0 0.0
    %1240 = vmatprep.subr.mxu0 0.0
    %1241 = vmatpush1.msra.mxu0 0.0
    %1242 = vmatprep.subr.mxu0 0.0
    %1243 = vmatpush1.msra.mxu0 0.0
    %1244 = vmatprep.subr.mxu0 0.0
    %1245 = vmatpush1.msra.mxu0 0.0
    %1246 = vmatprep.subr.mxu0 0.0
    %1247 = vmatpush1.msra.mxu0 0.0
    %1248 = vmatprep.subr.mxu0 0.0
    %1249 = vmatpush1.msra.mxu0 0.0
    %1250 = vmatprep.subr.mxu0 0.0
    %1251 = vmatpush1.msra.mxu0 0.0
    %1252 = vmatprep.subr.mxu0 0.0
    %1253 = vmatpush1.msra.mxu0 0.0
    %1254 = vmatprep.subr.mxu0 0.0
    %1255 = vmatpush1.msra.mxu0 0.0
    %1256 = vmatprep.subr.mxu0 0.0
    %1257 = vmatpush1.msra.mxu0 0.0
    %1258 = vmatprep.subr.mxu0 0.0
    %1259 = vmatpush1.msra.mxu0 0.0
    %1260 = vmatprep.subr.mxu0 0.0
    %1261 = vmatpush1.msra.mxu0 0.0
    %1262 = vmatprep.subr.mxu0 0.0
    %1263 = vmatpush1.msra.mxu0 0.0
    %1264 = vmatprep.mubr.f32.mxu0 0.0
    %1265 = vmatmul.mubr.f32.gmra.mrb[0].mxu0 %v1198
    %v1266 = vpop.f32.mrb[0].mxu0
    %v1267 = vadd.f32 %v371, %v1266
    %v1268 = vpop.f32.mrb[0].mxu0
    %1269 = vdwg.mxu0
    %v1270 = vmul.f32 %v1267, %v266
    %v1271 = vtanh.pop %v1270
    %v1272 = vmul.f32 %v1271, %v266
    %v1273 = vadd.f32 %v1272, %v267
    %v1274 = vmul.f32 %v1273, %v1081
    %1276 = vrot.lane.b32.xlu0 %v1273, 64
    %v1277 = vpop.permute.xlu0 %1276
    %v1279 = vmul.f32 %v1273, %v1277
    %1281 = vrot.lane.b32.xlu0 %v1279, 32
    %v1282 = vpop.permute.xlu0 %1281
    %v1284 = vadd.f32 %v1274, %v1282
    %v1285 = vtanh.pop %v1284
    %1287 = vrot.lane.b32.xlu0 %v1285, 64
    %v1288 = vpop.permute.xlu0 %1287
    %v1290 = vmul.f32 %v1273, %v1288
    %v1291 = vsel %vm179, %v1190, 0
    %1293 = vmatprep.subr.mxu0 0.0
    %1294 = vmatpush1.msra.mxu0 %v45
    %1295 = vmatprep.subr.mxu0 0.0
    %1296 = vmatpush1.msra.mxu0 %v46
    %1297 = vmatprep.subr.mxu0 0.0
    %1298 = vmatpush1.msra.mxu0 %v47
    %1299 = vmatprep.subr.mxu0 0.0
    %1300 = vmatpush1.msra.mxu0 %v48
    %1301 = vmatprep.subr.mxu0 0.0
    %1302 = vmatpush1.msra.mxu0 0.0
    %1303 = vmatprep.subr.mxu0 0.0
    %1304 = vmatpush1.msra.mxu0 0.0
    %1305 = vmatprep.subr.mxu0 0.0
    %1306 = vmatpush1.msra.mxu0 0.0
    %1307 = vmatprep.subr.mxu0 0.0
    %1308 = vmatpush1.msra.mxu0 0.0
    %1309 = vmatprep.subr.mxu0 0.0
    %1310 = vmatpush1.msra.mxu0 0.0
    %1311 = vmatprep.subr.mxu0 0.0
    %1312 = vmatpush1.msra.mxu0 0.0
    %1313 = vmatprep.subr.mxu0 0.0
    %1314 = vmatpush1.msra.mxu0 0.0
    %1315 = vmatprep.subr.mxu0 0.0
    %1316 = vmatpush1.msra.mxu0 0.0
    %1317 = vmatprep.subr.mxu0 0.0
    %1318 = vmatpush1.msra.mxu0 0.0
    %1319 = vmatprep.subr.mxu0 0.0
    %1320 = vmatpush1.msra.mxu0 0.0
    %1321 = vmatprep.subr.mxu0 0.0
    %1322 = vmatpush1.msra.mxu0 0.0
    %1323 = vmatprep.subr.mxu0 0.0
    %1324 = vmatpush1.msra.mxu0 0.0
    %1325 = vmatprep.subr.mxu0 0.0
    %1326 = vmatpush1.msra.mxu0 0.0
    %1327 = vmatprep.subr.mxu0 0.0
    %1328 = vmatpush1.msra.mxu0 0.0
    %1329 = vmatprep.subr.mxu0 0.0
    %1330 = vmatpush1.msra.mxu0 0.0
    %1331 = vmatprep.subr.mxu0 0.0
    %1332 = vmatpush1.msra.mxu0 0.0
    %1333 = vmatprep.subr.mxu0 0.0
    %1334 = vmatpush1.msra.mxu0 0.0
    %1335 = vmatprep.subr.mxu0 0.0
    %1336 = vmatpush1.msra.mxu0 0.0
    %1337 = vmatprep.subr.mxu0 0.0
    %1338 = vmatpush1.msra.mxu0 0.0
    %1339 = vmatprep.subr.mxu0 0.0
    %1340 = vmatpush1.msra.mxu0 0.0
    %1341 = vmatprep.subr.mxu0 0.0
    %1342 = vmatpush1.msra.mxu0 0.0
    %1343 = vmatprep.subr.mxu0 0.0
    %1344 = vmatpush1.msra.mxu0 0.0
    %1345 = vmatprep.subr.mxu0 0.0
    %1346 = vmatpush1.msra.mxu0 0.0
    %1347 = vmatprep.subr.mxu0 0.0
    %1348 = vmatpush1.msra.mxu0 0.0
    %1349 = vmatprep.subr.mxu0 0.0
    %1350 = vmatpush1.msra.mxu0 0.0
    %1351 = vmatprep.subr.mxu0 0.0
    %1352 = vmatpush1.msra.mxu0 0.0
    %1353 = vmatprep.subr.mxu0 0.0
    %1354 = vmatpush1.msra.mxu0 0.0
    %1355 = vmatprep.subr.mxu0 0.0
    %1356 = vmatpush1.msra.mxu0 0.0
    %1357 = vmatprep.mubr.f32.mxu0 0.0
    %1358 = vmatmul.mubr.f32.gmra.mrb[0].mxu0 %v1291
    %v1359 = vpop.f32.mrb[0].mxu0
    %v1360 = vadd.f32 0.0, %v1359
    %v1361 = vpop.f32.mrb[0].mxu0
    %1362 = vdwg.mxu0
    %v1364 = vrot.slane %v1360, 6
    %v1366 = vadd.f32 %v258, %v1364
    %v1367 = vmul.f32 %v1366, %v266
    %v1368 = vtanh.pop %v1367
    %v1369 = vmul.f32 %v1368, %v266
    %v1370 = vadd.f32 %v1369, %v267
    %v1372 = vrot.slane %v1181, 6
    %v1374 = vmul.f32 %v1370, %v1372
    %1376 = vrot.lane.b32.xlu0 %v1370, 64
    %v1377 = vpop.permute.xlu0 %1376
    %v1379 = vmul.f32 %v1370, %v1377
    %1381 = vrot.lane.b32.xlu0 %v1379, 32
    %v1382 = vpop.permute.xlu0 %1381
    %v1384 = vadd.f32 %v1374, %v1382
    %v1385 = vtanh.pop %v1384
    %1387 = vrot.lane.b32.xlu0 %v1385, 64
    %v1388 = vpop.permute.xlu0 %1387
    %v1390 = vmul.f32 %v1370, %v1388
    %1392 = vrot.lane.b32.xlu0 %v1390, 32
    %v1393 = vpop.permute.xlu0 %1392
    %v1396 = vrot.slane %v1290, 6
    %1397 = vrot.lane.b32.xlu0 %v1396, 64
    %v1398 = vpop.permute.xlu0 %1397
    %v1400 = vsel %vm179, %v1393, %v1398
    %v1402 = vrot.slane %v1400, 2
    %v1403 = vsel %vm372, %v1402, 0
    %1405 = vmatprep.subr.mxu0 0.0
    %1406 = vmatpush1.msra.mxu0 %v50
    %1407 = vmatprep.subr.mxu0 0.0
    %1408 = vmatpush1.msra.mxu0 %v51
    %1409 = vmatprep.subr.mxu0 0.0
    %1410 = vmatpush1.msra.mxu0 %v52
    %1411 = vmatprep.subr.mxu0 0.0
    %1412 = vmatpush1.msra.mxu0 %v53
    %1413 = vmatprep.subr.mxu0 0.0
    %1414 = vmatpush1.msra.mxu0 %v54
    %1415 = vmatprep.subr.mxu0 0.0
    %1416 = vmatpush1.msra.mxu0 %v55
    %1417 = vmatprep.subr.mxu0 0.0
    %1418 = vmatpush1.msra.mxu0 %v56
    %1419 = vmatprep.subr.mxu0 0.0
    %1420 = vmatpush1.msra.mxu0 %v57
    %1421 = vmatprep.subr.mxu0 0.0
    %1422 = vmatpush1.msra.mxu0 0.0
    %1423 = vmatprep.subr.mxu0 0.0
    %1424 = vmatpush1.msra.mxu0 0.0
    %1425 = vmatprep.subr.mxu0 0.0
    %1426 = vmatpush1.msra.mxu0 0.0
    %1427 = vmatprep.subr.mxu0 0.0
    %1428 = vmatpush1.msra.mxu0 0.0
    %1429 = vmatprep.subr.mxu0 0.0
    %1430 = vmatpush1.msra.mxu0 0.0
    %1431 = vmatprep.subr.mxu0 0.0
    %1432 = vmatpush1.msra.mxu0 0.0
    %1433 = vmatprep.subr.mxu0 0.0
    %1434 = vmatpush1.msra.mxu0 0.0
    %1435 = vmatprep.subr.mxu0 0.0
    %1436 = vmatpush1.msra.mxu0 0.0
    %1437 = vmatprep.subr.mxu0 0.0
    %1438 = vmatpush1.msra.mxu0 0.0
    %1439 = vmatprep.subr.mxu0 0.0
    %1440 = vmatpush1.msra.mxu0 0.0
    %1441 = vmatprep.subr.mxu0 0.0
    %1442 = vmatpush1.msra.mxu0 0.0
    %1443 = vmatprep.subr.mxu0 0.0
    %1444 = vmatpush1.msra.mxu0 0.0
    %1445 = vmatprep.subr.mxu0 0.0
    %1446 = vmatpush1.msra.mxu0 0.0
    %1447 = vmatprep.subr.mxu0 0.0
    %1448 = vmatpush1.msra.mxu0 0.0
    %1449 = vmatprep.subr.mxu0 0.0
    %1450 = vmatpush1.msra.mxu0 0.0
    %1451 = vmatprep.subr.mxu0 0.0
    %1452 = vmatpush1.msra.mxu0 0.0
    %1453 = vmatprep.subr.mxu0 0.0
    %1454 = vmatpush1.msra.mxu0 0.0
    %1455 = vmatprep.subr.mxu0 0.0
    %1456 = vmatpush1.msra.mxu0 0.0
    %1457 = vmatprep.subr.mxu0 0.0
    %1458 = vmatpush1.msra.mxu0 0.0
    %1459 = vmatprep.subr.mxu0 0.0
    %1460 = vmatpush1.msra.mxu0 0.0
    %1461 = vmatprep.subr.mxu0 0.0
    %1462 = vmatpush1.msra.mxu0 0.0
    %1463 = vmatprep.subr.mxu0 0.0
    %1464 = vmatpush1.msra.mxu0 0.0
    %1465 = vmatprep.subr.mxu0 0.0
    %1466 = vmatpush1.msra.mxu0 0.0
    %1467 = vmatprep.subr.mxu0 0.0
    %1468 = vmatpush1.msra.mxu0 0.0
    %1469 = vmatprep.mubr.f32.mxu0 0.0
    %1470 = vmatmul.mubr.f32.gmra.mrb[0].mxu0 %v1403
    %v1471 = vpop.f32.mrb[0].mxu0
    %v1472 = vadd.f32 %v371, %v1471
    %v1473 = vpop.f32.mrb[0].mxu0
    %1474 = vdwg.mxu0
    %v1475 = vmul.f32 %v1472, %v266
    %v1476 = vtanh.pop %v1475
    %v1477 = vmul.f32 %v1476, %v266
    %v1478 = vadd.f32 %v1477, %v267
    %v1479 = vmul.f32 %v1478, %v1284
    %1481 = vrot.lane.b32.xlu0 %v1478, 64
    %v1482 = vpop.permute.xlu0 %1481
    %v1484 = vmul.f32 %v1478, %v1482
    %1486 = vrot.lane.b32.xlu0 %v1484, 32
    %v1487 = vpop.permute.xlu0 %1486
    %v1489 = vadd.f32 %v1479, %v1487
    %v1490 = vtanh.pop %v1489
    %1492 = vrot.lane.b32.xlu0 %v1490, 64
    %v1493 = vpop.permute.xlu0 %1492
    %v1495 = vmul.f32 %v1478, %v1493
    %v1496 = vrot.slane %v1390, 2
    %1497 = vrot.lane.b32.xlu0 %v1496, 32
    %v1498 = vpop.permute.xlu0 %1497
    %v1499 = vsel %vm179, %v1498, 0
    %1501 = vmatprep.subr.mxu0 0.0
    %1502 = vmatpush1.msra.mxu0 %v45
    %1503 = vmatprep.subr.mxu0 0.0
    %1504 = vmatpush1.msra.mxu0 %v46
    %1505 = vmatprep.subr.mxu0 0.0
    %1506 = vmatpush1.msra.mxu0 %v47
    %1507 = vmatprep.subr.mxu0 0.0
    %1508 = vmatpush1.msra.mxu0 %v48
    %1509 = vmatprep.subr.mxu0 0.0
    %1510 = vmatpush1.msra.mxu0 0.0
    %1511 = vmatprep.subr.mxu0 0.0
    %1512 = vmatpush1.msra.mxu0 0.0
    %1513 = vmatprep.subr.mxu0 0.0
    %1514 = vmatpush1.msra.mxu0 0.0
    %1515 = vmatprep.subr.mxu0 0.0
    %1516 = vmatpush1.msra.mxu0 0.0
    %1517 = vmatprep.subr.mxu0 0.0
    %1518 = vmatpush1.msra.mxu0 0.0
    %1519 = vmatprep.subr.mxu0 0.0
    %1520 = vmatpush1.msra.mxu0 0.0
    %1521 = vmatprep.subr.mxu0 0.0
    %1522 = vmatpush1.msra.mxu0 0.0
    %1523 = vmatprep.subr.mxu0 0.0
    %1524 = vmatpush1.msra.mxu0 0.0
    %1525 = vmatprep.subr.mxu0 0.0
    %1526 = vmatpush1.msra.mxu0 0.0
    %1527 = vmatprep.subr.mxu0 0.0
    %1528 = vmatpush1.msra.mxu0 0.0
    %1529 = vmatprep.subr.mxu0 0.0
    %1530 = vmatpush1.msra.mxu0 0.0
    %1531 = vmatprep.subr.mxu0 0.0
    %1532 = vmatpush1.msra.mxu0 0.0
    %1533 = vmatprep.subr.mxu0 0.0
    %1534 = vmatpush1.msra.mxu0 0.0
    %1535 = vmatprep.subr.mxu0 0.0
    %1536 = vmatpush1.msra.mxu0 0.0
    %1537 = vmatprep.subr.mxu0 0.0
    %1538 = vmatpush1.msra.mxu0 0.0
    %1539 = vmatprep.subr.mxu0 0.0
    %1540 = vmatpush1.msra.mxu0 0.0
    %1541 = vmatprep.subr.mxu0 0.0
    %1542 = vmatpush1.msra.mxu0 0.0
    %1543 = vmatprep.subr.mxu0 0.0
    %1544 = vmatpush1.msra.mxu0 0.0
    %1545 = vmatprep.subr.mxu0 0.0
    %1546 = vmatpush1.msra.mxu0 0.0
    %1547 = vmatprep.subr.mxu0 0.0
    %1548 = vmatpush1.msra.mxu0 0.0
    %1549 = vmatprep.subr.mxu0 0.0
    %1550 = vmatpush1.msra.mxu0 0.0
    %1551 = vmatprep.subr.mxu0 0.0
    %1552 = vmatpush1.msra.mxu0 0.0
    %1553 = vmatprep.subr.mxu0 0.0
    %1554 = vmatpush1.msra.mxu0 0.0
    %1555 = vmatprep.subr.mxu0 0.0
    %1556 = vmatpush1.msra.mxu0 0.0
    %1557 = vmatprep.subr.mxu0 0.0
    %1558 = vmatpush1.msra.mxu0 0.0
    %1559 = vmatprep.subr.mxu0 0.0
    %1560 = vmatpush1.msra.mxu0 0.0
    %1561 = vmatprep.subr.mxu0 0.0
    %1562 = vmatpush1.msra.mxu0 0.0
    %1563 = vmatprep.subr.mxu0 0.0
    %1564 = vmatpush1.msra.mxu0 0.0
    %1565 = vmatprep.mubr.f32.mxu0 0.0
    %1566 = vmatmul.mubr.f32.gmra.mrb[0].mxu0 %v1499
    %v1567 = vpop.f32.mrb[0].mxu0
    %v1568 = vadd.f32 0.0, %v1567
    %v1569 = vpop.f32.mrb[0].mxu0
    %1570 = vdwg.mxu0
    %v1572 = vrot.slane %v1568, 4
    %v1574 = vadd.f32 %v258, %v1572
    %v1575 = vmul.f32 %v1574, %v266
    %v1576 = vtanh.pop %v1575
    %v1577 = vmul.f32 %v1576, %v266
    %v1578 = vadd.f32 %v1577, %v267
    %v1580 = vrot.slane %v1384, 6
    %v1582 = vmul.f32 %v1578, %v1580
    %1584 = vrot.lane.b32.xlu0 %v1578, 64
    %v1585 = vpop.permute.xlu0 %1584
    %v1587 = vmul.f32 %v1578, %v1585
    %1589 = vrot.lane.b32.xlu0 %v1587, 32
    %v1590 = vpop.permute.xlu0 %1589
    %v1592 = vadd.f32 %v1582, %v1590
    %v1593 = vtanh.pop %v1592
    %1595 = vrot.lane.b32.xlu0 %v1593, 64
    %v1596 = vpop.permute.xlu0 %1595
    %v1598 = vmul.f32 %v1578, %v1596
    %1600 = vrot.lane.b32.xlu0 %v1598, 32
    %v1601 = vpop.permute.xlu0 %1600
    %v1604 = vrot.slane %v1495, 4
    %1605 = vrot.lane.b32.xlu0 %v1604, 64
    %v1606 = vpop.permute.xlu0 %1605
    %v1608 = vsel %vm179, %v1601, %v1606
    %v1610 = vrot.slane %v1608, 4
    %v1611 = vsel %vm372, %v1610, 0
    %1613 = vmatprep.subr.mxu0 0.0
    %1614 = vmatpush1.msra.mxu0 %v50
    %1615 = vmatprep.subr.mxu0 0.0
    %1616 = vmatpush1.msra.mxu0 %v51
    %1617 = vmatprep.subr.mxu0 0.0
    %1618 = vmatpush1.msra.mxu0 %v52
    %1619 = vmatprep.subr.mxu0 0.0
    %1620 = vmatpush1.msra.mxu0 %v53
    %1621 = vmatprep.subr.mxu0 0.0
    %1622 = vmatpush1.msra.mxu0 %v54
    %1623 = vmatprep.subr.mxu0 0.0
    %1624 = vmatpush1.msra.mxu0 %v55
    %1625 = vmatprep.subr.mxu0 0.0
    %1626 = vmatpush1.msra.mxu0 %v56
    %1627 = vmatprep.subr.mxu0 0.0
    %1628 = vmatpush1.msra.mxu0 %v57
    %1629 = vmatprep.subr.mxu0 0.0
    %1630 = vmatpush1.msra.mxu0 0.0
    %1631 = vmatprep.subr.mxu0 0.0
    %1632 = vmatpush1.msra.mxu0 0.0
    %1633 = vmatprep.subr.mxu0 0.0
    %1634 = vmatpush1.msra.mxu0 0.0
    %1635 = vmatprep.subr.mxu0 0.0
    %1636 = vmatpush1.msra.mxu0 0.0
    %1637 = vmatprep.subr.mxu0 0.0
    %1638 = vmatpush1.msra.mxu0 0.0
    %1639 = vmatprep.subr.mxu0 0.0
    %1640 = vmatpush1.msra.mxu0 0.0
    %1641 = vmatprep.subr.mxu0 0.0
    %1642 = vmatpush1.msra.mxu0 0.0
    %1643 = vmatprep.subr.mxu0 0.0
    %1644 = vmatpush1.msra.mxu0 0.0
    %1645 = vmatprep.subr.mxu0 0.0
    %1646 = vmatpush1.msra.mxu0 0.0
    %1647 = vmatprep.subr.mxu0 0.0
    %1648 = vmatpush1.msra.mxu0 0.0
    %1649 = vmatprep.subr.mxu0 0.0
    %1650 = vmatpush1.msra.mxu0 0.0
    %1651 = vmatprep.subr.mxu0 0.0
    %1652 = vmatpush1.msra.mxu0 0.0
    %1653 = vmatprep.subr.mxu0 0.0
    %1654 = vmatpush1.msra.mxu0 0.0
    %1655 = vmatprep.subr.mxu0 0.0
    %1656 = vmatpush1.msra.mxu0 0.0
    %1657 = vmatprep.subr.mxu0 0.0
    %1658 = vmatpush1.msra.mxu0 0.0
    %1659 = vmatprep.subr.mxu0 0.0
    %1660 = vmatpush1.msra.mxu0 0.0
    %1661 = vmatprep.subr.mxu0 0.0
    %1662 = vmatpush1.msra.mxu0 0.0
    %1663 = vmatprep.subr.mxu0 0.0
    %1664 = vmatpush1.msra.mxu0 0.0
    %1665 = vmatprep.subr.mxu0 0.0
    %1666 = vmatpush1.msra.mxu0 0.0
    %1667 = vmatprep.subr.mxu0 0.0
    %1668 = vmatpush1.msra.mxu0 0.0
    %1669 = vmatprep.subr.mxu0 0.0
    %1670 = vmatpush1.msra.mxu0 0.0
    %1671 = vmatprep.subr.mxu0 0.0
    %1672 = vmatpush1.msra.mxu0 0.0
    %1673 = vmatprep.subr.mxu0 0.0
    %1674 = vmatpush1.msra.mxu0 0.0
    %1675 = vmatprep.subr.mxu0 0.0
    %1676 = vmatpush1.msra.mxu0 0.0
    %1677 = vmatprep.mubr.f32.mxu0 0.0
    %1678 = vmatmul.mubr.f32.gmra.mrb[0].mxu0 %v1611
    %v1679 = vpop.f32.mrb[0].mxu0
    %v1680 = vadd.f32 %v371, %v1679
    %v1681 = vpop.f32.mrb[0].mxu0
    %1682 = vdwg.mxu0
    %v1683 = vmul.f32 %v1680, %v266
    %v1684 = vtanh.pop %v1683
    %v1685 = vmul.f32 %v1684, %v266
    %v1686 = vadd.f32 %v1685, %v267
    %v1687 = vmul.f32 %v1686, %v1489
    %1689 = vrot.lane.b32.xlu0 %v1686, 64
    %v1690 = vpop.permute.xlu0 %1689
    %v1692 = vmul.f32 %v1686, %v1690
    %1694 = vrot.lane.b32.xlu0 %v1692, 32
    %v1695 = vpop.permute.xlu0 %1694
    %v1697 = vadd.f32 %v1687, %v1695
    %v1698 = vtanh.pop %v1697
    %1700 = vrot.lane.b32.xlu0 %v1698, 64
    %v1701 = vpop.permute.xlu0 %1700
    %v1703 = vmul.f32 %v1686, %v1701
    %v1704 = vrot.slane %v1598, 4
    %1705 = vrot.lane.b32.xlu0 %v1704, 32
    %v1706 = vpop.permute.xlu0 %1705
    %v1707 = vsel %vm179, %v1706, 0
    %1709 = vmatprep.subr.mxu0 0.0
    %1710 = vmatpush1.msra.mxu0 %v45
    %1711 = vmatprep.subr.mxu0 0.0
    %1712 = vmatpush1.msra.mxu0 %v46
    %1713 = vmatprep.subr.mxu0 0.0
    %1714 = vmatpush1.msra.mxu0 %v47
    %1715 = vmatprep.subr.mxu0 0.0
    %1716 = vmatpush1.msra.mxu0 %v48
    %1717 = vmatprep.subr.mxu0 0.0
    %1718 = vmatpush1.msra.mxu0 0.0
    %1719 = vmatprep.subr.mxu0 0.0
    %1720 = vmatpush1.msra.mxu0 0.0
    %1721 = vmatprep.subr.mxu0 0.0
    %1722 = vmatpush1.msra.mxu0 0.0
    %1723 = vmatprep.subr.mxu0 0.0
    %1724 = vmatpush1.msra.mxu0 0.0
    %1725 = vmatprep.subr.mxu0 0.0
    %1726 = vmatpush1.msra.mxu0 0.0
    %1727 = vmatprep.subr.mxu0 0.0
    %1728 = vmatpush1.msra.mxu0 0.0
    %1729 = vmatprep.subr.mxu0 0.0
    %1730 = vmatpush1.msra.mxu0 0.0
    %1731 = vmatprep.subr.mxu0 0.0
    %1732 = vmatpush1.msra.mxu0 0.0
    %1733 = vmatprep.subr.mxu0 0.0
    %1734 = vmatpush1.msra.mxu0 0.0
    %1735 = vmatprep.subr.mxu0 0.0
    %1736 = vmatpush1.msra.mxu0 0.0
    %1737 = vmatprep.subr.mxu0 0.0
    %1738 = vmatpush1.msra.mxu0 0.0
    %1739 = vmatprep.subr.mxu0 0.0
    %1740 = vmatpush1.msra.mxu0 0.0
    %1741 = vmatprep.subr.mxu0 0.0
    %1742 = vmatpush1.msra.mxu0 0.0
    %1743 = vmatprep.subr.mxu0 0.0
    %1744 = vmatpush1.msra.mxu0 0.0
    %1745 = vmatprep.subr.mxu0 0.0
    %1746 = vmatpush1.msra.mxu0 0.0
    %1747 = vmatprep.subr.mxu0 0.0
    %1748 = vmatpush1.msra.mxu0 0.0
    %1749 = vmatprep.subr.mxu0 0.0
    %1750 = vmatpush1.msra.mxu0 0.0
    %1751 = vmatprep.subr.mxu0 0.0
    %1752 = vmatpush1.msra.mxu0 0.0
    %1753 = vmatprep.subr.mxu0 0.0
    %1754 = vmatpush1.msra.mxu0 0.0
    %1755 = vmatprep.subr.mxu0 0.0
    %1756 = vmatpush1.msra.mxu0 0.0
    %1757 = vmatprep.subr.mxu0 0.0
    %1758 = vmatpush1.msra.mxu0 0.0
    %1759 = vmatprep.subr.mxu0 0.0
    %1760 = vmatpush1.msra.mxu0 0.0
    %1761 = vmatprep.subr.mxu0 0.0
    %1762 = vmatpush1.msra.mxu0 0.0
    %1763 = vmatprep.subr.mxu0 0.0
    %1764 = vmatpush1.msra.mxu0 0.0
    %1765 = vmatprep.subr.mxu0 0.0
    %1766 = vmatpush1.msra.mxu0 0.0
    %1767 = vmatprep.subr.mxu0 0.0
    %1768 = vmatpush1.msra.mxu0 0.0
    %1769 = vmatprep.subr.mxu0 0.0
    %1770 = vmatpush1.msra.mxu0 0.0
    %1771 = vmatprep.subr.mxu0 0.0
    %1772 = vmatpush1.msra.mxu0 0.0
    %1773 = vmatprep.mubr.f32.mxu0 0.0
    %1774 = vmatmul.mubr.f32.gmra.mrb[0].mxu0 %v1707
    %v1775 = vpop.f32.mrb[0].mxu0
    %v1776 = vadd.f32 0.0, %v1775
    %v1777 = vpop.f32.mrb[0].mxu0
    %1778 = vdwg.mxu0
    %v1780 = vrot.slane %v1776, 2
    %v1782 = vadd.f32 %v258, %v1780
    %v1783 = vmul.f32 %v1782, %v266
    %v1784 = vtanh.pop %v1783
    %v1785 = vmul.f32 %v1784, %v266
    %v1786 = vadd.f32 %v1785, %v267
    %v1788 = vrot.slane %v1592, 6
    %v1790 = vmul.f32 %v1786, %v1788
    %1792 = vrot.lane.b32.xlu0 %v1786, 64
    %v1793 = vpop.permute.xlu0 %1792
    %v1795 = vmul.f32 %v1786, %v1793
    %1797 = vrot.lane.b32.xlu0 %v1795, 32
    %v1798 = vpop.permute.xlu0 %1797
    %v1800 = vadd.f32 %v1790, %v1798
    %v1801 = vtanh.pop %v1800
    %1803 = vrot.lane.b32.xlu0 %v1801, 64
    %v1804 = vpop.permute.xlu0 %1803
    %v1806 = vmul.f32 %v1786, %v1804
    %1808 = vrot.lane.b32.xlu0 %v1806, 32
    %v1809 = vpop.permute.xlu0 %1808
    %v1812 = vrot.slane %v1703, 2
    %1813 = vrot.lane.b32.xlu0 %v1812, 64
    %v1814 = vpop.permute.xlu0 %1813
    %v1816 = vsel %vm179, %v1809, %v1814
    %v1818 = vrot.slane %v1816, 6
    %v1819 = vsel %vm372, %v1818, 0
    %1821 = vmatprep.subr.mxu0 0.0
    %1822 = vmatpush1.msra.mxu0 %v50
    %1823 = vmatprep.subr.mxu0 0.0
    %1824 = vmatpush1.msra.mxu0 %v51
    %1825 = vmatprep.subr.mxu0 0.0
    %1826 = vmatpush1.msra.mxu0 %v52
    %1827 = vmatprep.subr.mxu0 0.0
    %1828 = vmatpush1.msra.mxu0 %v53
    %1829 = vmatprep.subr.mxu0 0.0
    %1830 = vmatpush1.msra.mxu0 %v54
    %1831 = vmatprep.subr.mxu0 0.0
    %1832 = vmatpush1.msra.mxu0 %v55
    %1833 = vmatprep.subr.mxu0 0.0
    %1834 = vmatpush1.msra.mxu0 %v56
    %1835 = vmatprep.subr.mxu0 0.0
    %1836 = vmatpush1.msra.mxu0 %v57
    %1837 = vmatprep.subr.mxu0 0.0
    %1838 = vmatpush1.msra.mxu0 0.0
    %1839 = vmatprep.subr.mxu0 0.0
    %1840 = vmatpush1.msra.mxu0 0.0
    %1841 = vmatprep.subr.mxu0 0.0
    %1842 = vmatpush1.msra.mxu0 0.0
    %1843 = vmatprep.subr.mxu0 0.0
    %1844 = vmatpush1.msra.mxu0 0.0
    %1845 = vmatprep.subr.mxu0 0.0
    %1846 = vmatpush1.msra.mxu0 0.0
    %1847 = vmatprep.subr.mxu0 0.0
    %1848 = vmatpush1.msra.mxu0 0.0
    %1849 = vmatprep.subr.mxu0 0.0
    %1850 = vmatpush1.msra.mxu0 0.0
    %1851 = vmatprep.subr.mxu0 0.0
    %1852 = vmatpush1.msra.mxu0 0.0
    %1853 = vmatprep.subr.mxu0 0.0
    %1854 = vmatpush1.msra.mxu0 0.0
    %1855 = vmatprep.subr.mxu0 0.0
    %1856 = vmatpush1.msra.mxu0 0.0
    %1857 = vmatprep.subr.mxu0 0.0
    %1858 = vmatpush1.msra.mxu0 0.0
    %1859 = vmatprep.subr.mxu0 0.0
    %1860 = vmatpush1.msra.mxu0 0.0
    %1861 = vmatprep.subr.mxu0 0.0
    %1862 = vmatpush1.msra.mxu0 0.0
    %1863 = vmatprep.subr.mxu0 0.0
    %1864 = vmatpush1.msra.mxu0 0.0
    %1865 = vmatprep.subr.mxu0 0.0
    %1866 = vmatpush1.msra.mxu0 0.0
    %1867 = vmatprep.subr.mxu0 0.0
    %1868 = vmatpush1.msra.mxu0 0.0
    %1869 = vmatprep.subr.mxu0 0.0
    %1870 = vmatpush1.msra.mxu0 0.0
    %1871 = vmatprep.subr.mxu0 0.0
    %1872 = vmatpush1.msra.mxu0 0.0
    %1873 = vmatprep.subr.mxu0 0.0
    %1874 = vmatpush1.msra.mxu0 0.0
    %1875 = vmatprep.subr.mxu0 0.0
    %1876 = vmatpush1.msra.mxu0 0.0
    %1877 = vmatprep.subr.mxu0 0.0
    %1878 = vmatpush1.msra.mxu0 0.0
    %1879 = vmatprep.subr.mxu0 0.0
    %1880 = vmatpush1.msra.mxu0 0.0
    %1881 = vmatprep.subr.mxu0 0.0
    %1882 = vmatpush1.msra.mxu0 0.0
    %1883 = vmatprep.subr.mxu0 0.0
    %1884 = vmatpush1.msra.mxu0 0.0
    %1885 = vmatprep.mubr.f32.mxu0 0.0
    %1886 = vmatmul.mubr.f32.gmra.mrb[0].mxu0 %v1819
    %v1887 = vpop.f32.mrb[0].mxu0
    %v1888 = vadd.f32 %v371, %v1887
    %v1889 = vpop.f32.mrb[0].mxu0
    %1890 = vdwg.mxu0
    %v1891 = vmul.f32 %v1888, %v266
    %v1892 = vtanh.pop %v1891
    %v1893 = vmul.f32 %v1892, %v266
    %v1894 = vadd.f32 %v1893, %v267
    %v1895 = vmul.f32 %v1894, %v1697
    %1897 = vrot.lane.b32.xlu0 %v1894, 64
    %v1898 = vpop.permute.xlu0 %1897
    %v1900 = vmul.f32 %v1894, %v1898
    %1902 = vrot.lane.b32.xlu0 %v1900, 32
    %v1903 = vpop.permute.xlu0 %1902
    %v1905 = vadd.f32 %v1895, %v1903
    %v1906 = vtanh.pop %v1905
    %1908 = vrot.lane.b32.xlu0 %v1906, 64
    %v1909 = vpop.permute.xlu0 %1908
    %v1911 = vmul.f32 %v1894, %v1909
    %v1912 = vrot.slane %v671, 6
    %v1914 = vrot.slane %v879, 4
    %v1916 = vrot.slane %v1087, 2
    %v1918 = vrot.slane %v1495, 6
    %v1920 = vrot.slane %v1703, 4
    %v1923 = vrot.slane %v1911, 2
    %v1925 = vsel %vm156, %v466, %v1912
    %v1926 = vsel %vm160, %v1925, %v1914
    %v1927 = vsel %vm164, %v1926, %v1916
    %v1928 = vsel %vm156, %v1290, %v1918
    %v1929 = vsel %vm160, %v1928, %v1920
    %v1930 = vsel %vm164, %v1929, %v1923
    %v1931 = vlaneseq
    %v1932 = vshrl.u32 %v1931, 7
    %v1933 = vsub.s32 0, %v1932
    %v1934 = vrot.slane %v63, %v1933
    %1937 = vrot.lane.b32.xlu0 %v1927, 32
    %v1938 = vpop.permute.xlu0 %1937
    %1939 = vrot.lane.b32.xlu0 %v1930, 32
    %v1940 = vpop.permute.xlu0 %1939
    %v1941 = vsel %vm179, %v1938, 0
    %v1943 = vsel %vm179, %v1940, 0
    %1945 = vmatprep.subr.mxu0 0.0
    %1946 = vmatpush1.msra.mxu0 %v59
    %1947 = vmatprep.subr.mxu0 0.0
    %1948 = vmatpush1.msra.mxu0 %v60
    %1949 = vmatprep.subr.mxu0 0.0
    %1950 = vmatpush1.msra.mxu0 %v61
    %1951 = vmatprep.subr.mxu0 0.0
    %1952 = vmatpush1.msra.mxu0 %v62
    %1953 = vmatprep.subr.mxu0 0.0
    %1954 = vmatpush1.msra.mxu0 0.0
    %1955 = vmatprep.subr.mxu0 0.0
    %1956 = vmatpush1.msra.mxu0 0.0
    %1957 = vmatprep.subr.mxu0 0.0
    %1958 = vmatpush1.msra.mxu0 0.0
    %1959 = vmatprep.subr.mxu0 0.0
    %1960 = vmatpush1.msra.mxu0 0.0
    %1961 = vmatprep.subr.mxu0 0.0
    %1962 = vmatpush1.msra.mxu0 0.0
    %1963 = vmatprep.subr.mxu0 0.0
    %1964 = vmatpush1.msra.mxu0 0.0
    %1965 = vmatprep.subr.mxu0 0.0
    %1966 = vmatpush1.msra.mxu0 0.0
    %1967 = vmatprep.subr.mxu0 0.0
    %1968 = vmatpush1.msra.mxu0 0.0
    %1969 = vmatprep.subr.mxu0 0.0
    %1970 = vmatpush1.msra.mxu0 0.0
    %1971 = vmatprep.subr.mxu0 0.0
    %1972 = vmatpush1.msra.mxu0 0.0
    %1973 = vmatprep.subr.mxu0 0.0
    %1974 = vmatpush1.msra.mxu0 0.0
    %1975 = vmatprep.subr.mxu0 0.0
    %1976 = vmatpush1.msra.mxu0 0.0
    %1977 = vmatprep.subr.mxu0 0.0
    %1978 = vmatpush1.msra.mxu0 0.0
    %1979 = vmatprep.subr.mxu0 0.0
    %1980 = vmatpush1.msra.mxu0 0.0
    %1981 = vmatprep.subr.mxu0 0.0
    %1982 = vmatpush1.msra.mxu0 0.0
    %1983 = vmatprep.subr.mxu0 0.0
    %1984 = vmatpush1.msra.mxu0 0.0
    %1985 = vmatprep.subr.mxu0 0.0
    %1986 = vmatpush1.msra.mxu0 0.0
    %1987 = vmatprep.subr.mxu0 0.0
    %1988 = vmatpush1.msra.mxu0 0.0
    %1989 = vmatprep.subr.mxu0 0.0
    %1990 = vmatpush1.msra.mxu0 0.0
    %1991 = vmatprep.subr.mxu0 0.0
    %1992 = vmatpush1.msra.mxu0 0.0
    %1993 = vmatprep.subr.mxu0 0.0
    %1994 = vmatpush1.msra.mxu0 0.0
    %1995 = vmatprep.subr.mxu0 0.0
    %1996 = vmatpush1.msra.mxu0 0.0
    %1997 = vmatprep.subr.mxu0 0.0
    %1998 = vmatpush1.msra.mxu0 0.0
    %1999 = vmatprep.subr.mxu0 0.0
    %2000 = vmatpush1.msra.mxu0 0.0
    %2001 = vmatprep.subr.mxu0 0.0
    %2002 = vmatpush1.msra.mxu0 0.0
    %2003 = vmatprep.subr.mxu0 0.0
    %2004 = vmatpush1.msra.mxu0 0.0
    %2005 = vmatprep.subr.mxu0 0.0
    %2006 = vmatpush1.msra.mxu0 0.0
    %2007 = vmatprep.subr.mxu0 0.0
    %2008 = vmatpush1.msra.mxu0 0.0
    %2009 = vmatprep.mubr.f32.mxu0 0.0
    %2010 = vmatmul.mubr.f32.gmra.mrb[0].mxu0 %v1941
    %v2011 = vpop.f32.mrb[0].mxu0
    %v2012 = vadd.f32 %v1934, %v2011
    %v2013 = vpop.f32.mrb[0].mxu0
    %2014 = vmatprep.mubr.f32.mxu0 0.0
    %2015 = vmatmul.mubr.f32.gmra.mrb[0].mxu0 %v1943
    %v2016 = vpop.f32.mrb[0].mxu0
    %v2017 = vadd.f32 %v1934, %v2016
    %v2018 = vpop.f32.mrb[0].mxu0
    %2019 = vdwg.mxu0
    %2020 = vst [vmem:[%s3] sm:$0xff] %v2012
    %2021 = vst [vmem:[%s3 + $0x8] sm:$0xff] %v2017
    // Predicated region
    $region22: #{forward.1} parent=1 // pred_check
      _
    $region23: #{forward.1} parent=1 // pred_check_branch
      %2023 = sbr.rel (0) target = $region25
    $region24: #{forward.1} parent=1 // pred_region
      _
    $region25: #{forward.1} parent=1 // pred_fallthru
      _
    // Predicated region
    $region26: #{forward.1} parent=1 // pred_check
      _
    $region27: #{forward.1} parent=1 // pred_check_branch
      %2025 = sbr.rel (0) target = $region29
    $region28: #{forward.1} parent=1 // pred_region
      _
    $region29: #{forward.1} parent=1 // pred_fallthru
      _
    %2026 = vsyncpa [#allocation3], 1
    %2027 = vsyncpa [#allocation4], 1

</llo_original>
